<compile_context>
chip_gen: v5e
topology: v5e:2x2
jax: 0.10.0
libtpu: 0.0.40
codegen_flags: <defaults>
</compile_context>

<pallas_src>
import functools

import jax
import jax.numpy as jnp
from jax.experimental import pallas as pl
from jax.experimental.pallas import tpu as pltpu


def _round_up(x, m):
    return ((x + m - 1) // m) * m


# ---------------------------------------------------------------------------
# Fused kernel: point MLP -> vectorized scatter-max -> out MLP
#   grid = (num_source_tiles,)   ["arbitrary": pooled accumulator is resident]
#   scalar prefetch: per-tile [kmin, kmax] keypoint ranges (tiny SMEM array)
# ---------------------------------------------------------------------------
def _fused_kernel(kr_ref, x_ref, key_ref, *rest,
                  n_point_layers, n_out_layers, compute_dtype):
    n_params = 4 * (n_point_layers + n_out_layers)
    params = rest[:n_params]
    o_ref, acc_ref = rest[n_params:]
    j = pl.program_id(0)

    def dense(a, pos):
        w, b, sc, sh = params[pos:pos + 4]
        y = jnp.dot(a.astype(compute_dtype), w[...].astype(compute_dtype),
                    preferred_element_type=jnp.float32) + b[...]
        return jnp.maximum(y, 0.0) * sc[...] + sh[...]      # Linear->ReLU->BN

    # ---- init pooled accumulator (zero init == torch scatter_max(out=zeros)) --
    @pl.when(j == 0)
    def _():
        acc_ref[...] = jnp.zeros_like(acc_ref)

    # ---- point MLP on the pre-concatenated [feat | rel] tile -----------------
    h = x_ref[...].astype(jnp.float32)                       # (tile_s, M+D)
    for li in range(n_point_layers):
        h = dense(h, 4 * li)                                 # (tile_s, c_mid)

    # ---- vectorized scatter-max: keys are sorted, so only [kmin, kmax] -------
    keys = key_ref[...]                                      # (tile_s, 1) int32
    kmin = kr_ref[2 * j]
    kmax = kr_ref[2 * j + 1]
    neg = jnp.float32(-3.0e38)

    def seg_body(k, carry):
        seg = jnp.max(jnp.where(keys == k, h, neg), axis=0, keepdims=True)
        acc_ref[pl.ds(k, 1), :] = jnp.maximum(acc_ref[pl.ds(k, 1), :], seg)
        return carry

    jax.lax.fori_loop(kmin, kmax + 1, seg_body, 0)           # 0 iters if empty

    # ---- finalize: fused out MLP on pooled features ---------------------------
    @pl.when(j == pl.num_programs(0) - 1)
    def _():
        g = acc_ref[...]
        for li in range(n_out_layers):
            g = dense(g, 4 * (n_point_layers + li))
        o_ref[...] = g.astype(o_ref.dtype)


# ---------------------------------------------------------------------------
# PointSetPooling forward
# ---------------------------------------------------------------------------
def point_set_pooling(point_features, point_coordinates, vertices,
                      point_layers, out_layers, *,
                      tile_s=2048, compute_dtype=jnp.float32):
    """point_features [N, M], point_coordinates [N, D], vertices [S, 2] int32."""
    n_keypoints, m = point_features.shape
    d = point_coordinates.shape[1]
    s = vertices.shape[0]

    # ---- sort pairs by keypoint so each tile covers few distinct keypoints ----
    k_idx = vertices[:, 1].astype(jnp.int32)
    order = jnp.argsort(k_idx)
    p_idx = vertices[:, 0].astype(jnp.int32)[order]
    k_idx = k_idx[order]

    # ---- gather + concat front end: single [S, M+D] stream, one K=M+D matmul --
    rel = point_coordinates[p_idx] - point_coordinates[k_idx]
    x_in = jnp.concatenate([point_features[p_idx], rel],
                           axis=-1).astype(jnp.float32)              # [S, M+D]

    # ---- padding / tiling ------------------------------------------------------
    n_out_pad = _round_up(n_keypoints, 8)
    tile_s = _round_up(min(int(tile_s), _round_up(s, 16)), 16)
    s_pad = _round_up(s, tile_s)
    num_tiles = s_pad // tile_s

    x_in = jnp.pad(x_in, ((0, s_pad - s), (0, 0)))
    pad_key = jnp.int32(n_keypoints)          # padded rows never match a real key
    keys = jnp.pad(k_idx, (0, s_pad - s), constant_values=pad_key)

    # per-tile [kmin, kmax] key ranges -> tiny scalar-prefetch table
    keys_t = keys.reshape(num_tiles, tile_s)
    valid = keys_t < n_keypoints
    kmin = jnp.where(valid, keys_t, n_keypoints).min(axis=1)
    kmax = jnp.where(valid, keys_t, -1).max(axis=1)
    kranges = jnp.stack([kmin, kmax], axis=1).reshape(-1).astype(jnp.int32)

    keys2d = keys.reshape(s_pad, 1)

    # ---- flatten parameters -----------------------------------------------------
    flat = []
    for (w, b, sc, sh) in list(point_layers) + list(out_layers):
        flat += [w, b, sc, sh]

    c_mid = point_layers[-1][0].shape[1]
    c_out = out_layers[-1][0].shape[1]

    in_specs = [pl.BlockSpec((tile_s, m + d), lambda j, kr: (j, 0)),
                pl.BlockSpec((tile_s, 1), lambda j, kr: (j, 0))]
    for arr in flat:
        in_specs.append(pl.BlockSpec(arr.shape, lambda j, kr: (0, 0)))

    kernel = functools.partial(
        _fused_kernel,
        n_point_layers=len(point_layers), n_out_layers=len(out_layers),
        compute_dtype=compute_dtype)

    out = pl.pallas_call(
        kernel,
        out_shape=jax.ShapeDtypeStruct((n_out_pad, c_out), jnp.float32),
        grid_spec=pltpu.PrefetchScalarGridSpec(
            num_scalar_prefetch=1,
            grid=(num_tiles,),
            in_specs=in_specs,
            out_specs=pl.BlockSpec((n_out_pad, c_out), lambda j, kr: (0, 0)),
            scratch_shapes=[pltpu.VMEM((n_out_pad, c_mid), jnp.float32)]),
        compiler_params=pltpu.CompilerParams(
            dimension_semantics=("arbitrary",)),
    )(kranges, x_in, keys2d, *flat)
    return out[:n_keypoints]


# ---------------------------------------------------------------------------
# deterministic parameter init (Linear + folded BatchNorm1d, inference mode)
# ---------------------------------------------------------------------------
def init_mlp_params(key, depth_list):
    layers = []
    for i in range(1, len(depth_list)):
        kin, kout = depth_list[i - 1], depth_list[i]
        key, k1, k2, k3, k4 = jax.random.split(key, 5)
        w = jax.random.normal(k1, (kin, kout), jnp.float32) / jnp.sqrt(float(kin))
        b = 0.01 * jax.random.normal(k2, (1, kout), jnp.float32)
        gamma = 1.0 + 0.1 * jax.random.normal(k3, (1, kout), jnp.float32)
        beta = 0.05 * jax.random.normal(k4, (1, kout), jnp.float32)
        running_mean = jnp.zeros((1, kout), jnp.float32)
        running_var = jnp.ones((1, kout), jnp.float32)
        eps = 1e-5
        scale = gamma / jnp.sqrt(running_var + eps)
        shift = beta - running_mean * scale
        layers.append((w, b, scale, shift))
    return layers, key


# ---------------------------------------------------------------------------
# pure-JAX reference (sanity check)
# ---------------------------------------------------------------------------
def reference(point_features, point_coordinates, vertices, point_layers, out_layers):
    n = point_features.shape[0]
    rel = point_coordinates[vertices[:, 0]] - point_coordinates[vertices[:, 1]]
    x = jnp.concatenate([point_features[vertices[:, 0]], rel], -1)

    def mlp(h, layers):
        for w, b, sc, sh in layers:
            h = jnp.maximum(
                jnp.dot(h, w, precision=jax.lax.Precision.HIGHEST) + b, 0.0)
            h = h * sc + sh
        return h

    x = mlp(x, point_layers)
    pooled = jnp.zeros((n, x.shape[-1]), x.dtype).at[vertices[:, 1]].max(x)
    return mlp(pooled, out_layers)


if __name__ == "__main__":
    key = jax.random.PRNGKey(0)
    N, M, D, S = 24, 32, 3, 300     # N points (== keypoints), 32-d feats, 3-d coords, S pairs
    key, kf, kc, kv0, kv1, kp = jax.random.split(key, 6)
    point_features = jax.random.normal(kf, (N, M), jnp.float32)
    point_coordinates = jax.random.normal(kc, (N, D), jnp.float32)
    vertices = jnp.stack(
        [jax.random.randint(kv0, (S,), 0, N, jnp.int32),
         jax.random.randint(kv1, (S,), 0, N, jnp.int32)], axis=1)

    point_layers, kp = init_mlp_params(kp, [M + D, 64, 64, 32])
    out_layers, _ = init_mlp_params(kp, [32, 32, 32])

    # small tile_s here to exercise the multi-step reduction/accumulator path
    out = point_set_pooling(point_features, point_coordinates, vertices,
                            point_layers, out_layers, tile_s=128)
    out = jax.block_until_ready(out)
    assert out.shape == (N, 32) and out.dtype == jnp.float32

    ref = reference(point_features, point_coordinates, vertices,
                    point_layers, out_layers)
    assert jnp.allclose(out, ref, rtol=2e-2, atol=2e-2), \
        float(jnp.max(jnp.abs(out - ref)))

    print("KERNEL_OK")
</pallas_src>

<mosaic_0001>
module attributes {stable_mosaic.version = 11 : i64} {
  func.func @_fused_kernel(%arg0: i32, %arg1: memref<6xi32, #tpu.memory_space<smem>>, %arg2: memref<128x35xf32, #tpu.memory_space<vmem>>, %arg3: memref<128x1xi32, #tpu.memory_space<vmem>>, %arg4: memref<35x64xf32, #tpu.memory_space<vmem>>, %arg5: memref<1x64xf32, #tpu.memory_space<vmem>>, %arg6: memref<1x64xf32, #tpu.memory_space<vmem>>, %arg7: memref<1x64xf32, #tpu.memory_space<vmem>>, %arg8: memref<64x64xf32, #tpu.memory_space<vmem>>, %arg9: memref<1x64xf32, #tpu.memory_space<vmem>>, %arg10: memref<1x64xf32, #tpu.memory_space<vmem>>, %arg11: memref<1x64xf32, #tpu.memory_space<vmem>>, %arg12: memref<64x32xf32, #tpu.memory_space<vmem>>, %arg13: memref<1x32xf32, #tpu.memory_space<vmem>>, %arg14: memref<1x32xf32, #tpu.memory_space<vmem>>, %arg15: memref<1x32xf32, #tpu.memory_space<vmem>>, %arg16: memref<32x32xf32, #tpu.memory_space<vmem>>, %arg17: memref<1x32xf32, #tpu.memory_space<vmem>>, %arg18: memref<1x32xf32, #tpu.memory_space<vmem>>, %arg19: memref<1x32xf32, #tpu.memory_space<vmem>>, %arg20: memref<32x32xf32, #tpu.memory_space<vmem>>, %arg21: memref<1x32xf32, #tpu.memory_space<vmem>>, %arg22: memref<1x32xf32, #tpu.memory_space<vmem>>, %arg23: memref<1x32xf32, #tpu.memory_space<vmem>>, %arg24: memref<24x32xf32, #tpu.memory_space<vmem>>, %arg25: memref<24x32xf32, #tpu.memory_space<vmem>>) attributes {dimension_semantics = [#tpu.dimension_semantics<arbitrary>], iteration_bounds = array<i64: 3>, scalar_prefetch = 1 : i64, scratch_operands = 1 : i64, tpu.core_type = #tpu.core_type<tc>, window_params = [{transform_indices = @transform_0, window_bounds = array<i64: 128, 35>}, {transform_indices = @transform_1, window_bounds = array<i64: 128, 1>}, {pipeline_mode = #tpu.pipeline_mode<synchronous>, transform_indices = @transform_2, window_bounds = array<i64: 35, 64>}, {pipeline_mode = #tpu.pipeline_mode<synchronous>, transform_indices = @transform_3, window_bounds = array<i64: 1, 64>}, {pipeline_mode = #tpu.pipeline_mode<synchronous>, transform_indices = @transform_4, window_bounds = array<i64: 1, 64>}, {pipeline_mode = #tpu.pipeline_mode<synchronous>, transform_indices = @transform_5, window_bounds = array<i64: 1, 64>}, {pipeline_mode = #tpu.pipeline_mode<synchronous>, transform_indices = @transform_6, window_bounds = array<i64: 64, 64>}, {pipeline_mode = #tpu.pipeline_mode<synchronous>, transform_indices = @transform_7, window_bounds = array<i64: 1, 64>}, {pipeline_mode = #tpu.pipeline_mode<synchronous>, transform_indices = @transform_8, window_bounds = array<i64: 1, 64>}, {pipeline_mode = #tpu.pipeline_mode<synchronous>, transform_indices = @transform_9, window_bounds = array<i64: 1, 64>}, {pipeline_mode = #tpu.pipeline_mode<synchronous>, transform_indices = @transform_10, window_bounds = array<i64: 64, 32>}, {pipeline_mode = #tpu.pipeline_mode<synchronous>, transform_indices = @transform_11, window_bounds = array<i64: 1, 32>}, {pipeline_mode = #tpu.pipeline_mode<synchronous>, transform_indices = @transform_12, window_bounds = array<i64: 1, 32>}, {pipeline_mode = #tpu.pipeline_mode<synchronous>, transform_indices = @transform_13, window_bounds = array<i64: 1, 32>}, {pipeline_mode = #tpu.pipeline_mode<synchronous>, transform_indices = @transform_14, window_bounds = array<i64: 32, 32>}, {pipeline_mode = #tpu.pipeline_mode<synchronous>, transform_indices = @transform_15, window_bounds = array<i64: 1, 32>}, {pipeline_mode = #tpu.pipeline_mode<synchronous>, transform_indices = @transform_16, window_bounds = array<i64: 1, 32>}, {pipeline_mode = #tpu.pipeline_mode<synchronous>, transform_indices = @transform_17, window_bounds = array<i64: 1, 32>}, {pipeline_mode = #tpu.pipeline_mode<synchronous>, transform_indices = @transform_18, window_bounds = array<i64: 32, 32>}, {pipeline_mode = #tpu.pipeline_mode<synchronous>, transform_indices = @transform_19, window_bounds = array<i64: 1, 32>}, {pipeline_mode = #tpu.pipeline_mode<synchronous>, transform_indices = @transform_20, window_bounds = array<i64: 1, 32>}, {pipeline_mode = #tpu.pipeline_mode<synchronous>, transform_indices = @transform_21, window_bounds = array<i64: 1, 32>}, {pipeline_mode = #tpu.pipeline_mode<synchronous>, transform_indices = @transform_22, window_bounds = array<i64: 24, 32>}]} {
    %c0_i32 = arith.constant 0 : i32
    %0 = arith.cmpi eq, %arg0, %c0_i32 : i32
    %1 = arith.extui %0 : i1 to i32
    %c0_i32_0 = arith.constant 0 : i32
    %2 = arith.cmpi ne, %1, %c0_i32_0 : i32
    scf.if %2 {
      %cst_40 = arith.constant 0.000000e+00 : f32
      %57 = vector.broadcast %cst_40 : f32 to vector<24x32xf32>
      %c0_41 = arith.constant 0 : index
      %c0_42 = arith.constant 0 : index
      %58 = vector.load %arg25[%c0_41, %c0_42] : memref<24x32xf32, #tpu.memory_space<vmem>>, vector<24x32xf32>
      tpu.vector_store %arg25[%c0_41, %c0_42], %57 {strides = array<i32>} : memref<24x32xf32, #tpu.memory_space<vmem>>, vector<24x32xf32>,
    } else {
    }
    %c0 = arith.constant 0 : index
    %c0_1 = arith.constant 0 : index
    %3 = vector.load %arg2[%c0, %c0_1] : memref<128x35xf32, #tpu.memory_space<vmem>>, vector<128x35xf32>
    %c0_2 = arith.constant 0 : index
    %c0_3 = arith.constant 0 : index
    %4 = vector.load %arg4[%c0_2, %c0_3] : memref<35x64xf32, #tpu.memory_space<vmem>>, vector<35x64xf32>
    %cst = arith.constant dense<0.000000e+00> : vector<128x64xf32>
    %5 = tpu.matmul %3, %4, %cst {dimension_numbers = #tpu.dot_dimension_numbers<[1], [0], [0], [1], [0, 0, 1, 1], [], []>} : vector<128x35xf32>, vector<35x64xf32>, vector<128x64xf32> -> vector<128x64xf32>
    %c0_4 = arith.constant 0 : index
    %c0_5 = arith.constant 0 : index
    %6 = vector.load %arg5[%c0_4, %c0_5] : memref<1x64xf32, #tpu.memory_space<vmem>>, vector<1x64xf32>
    %7 = vector.broadcast %6 : vector<1x64xf32> to vector<128x64xf32>
    %8 = arith.addf %5, %7 : vector<128x64xf32>
    %cst_6 = arith.constant 0.000000e+00 : f32
    %9 = vector.broadcast %cst_6 : f32 to vector<128x64xf32>
    %10 = arith.maximumf %8, %9 : vector<128x64xf32>
    %c0_7 = arith.constant 0 : index
    %c0_8 = arith.constant 0 : index
    %11 = vector.load %arg6[%c0_7, %c0_8] : memref<1x64xf32, #tpu.memory_space<vmem>>, vector<1x64xf32>
    %12 = vector.broadcast %11 : vector<1x64xf32> to vector<128x64xf32>
    %13 = arith.mulf %10, %12 : vector<128x64xf32>
    %c0_9 = arith.constant 0 : index
    %c0_10 = arith.constant 0 : index
    %14 = vector.load %arg7[%c0_9, %c0_10] : memref<1x64xf32, #tpu.memory_space<vmem>>, vector<1x64xf32>
    %15 = vector.broadcast %14 : vector<1x64xf32> to vector<128x64xf32>
    %16 = arith.addf %13, %15 : vector<128x64xf32>
    %c0_11 = arith.constant 0 : index
    %c0_12 = arith.constant 0 : index
    %17 = vector.load %arg8[%c0_11, %c0_12] : memref<64x64xf32, #tpu.memory_space<vmem>>, vector<64x64xf32>
    %cst_13 = arith.constant dense<0.000000e+00> : vector<128x64xf32>
    %18 = tpu.matmul %16, %17, %cst_13 {dimension_numbers = #tpu.dot_dimension_numbers<[1], [0], [0], [1], [0, 0, 1, 1], [], []>} : vector<128x64xf32>, vector<64x64xf32>, vector<128x64xf32> -> vector<128x64xf32>
    %c0_14 = arith.constant 0 : index
    %c0_15 = arith.constant 0 : index
    %19 = vector.load %arg9[%c0_14, %c0_15] : memref<1x64xf32, #tpu.memory_space<vmem>>, vector<1x64xf32>
    %20 = vector.broadcast %19 : vector<1x64xf32> to vector<128x64xf32>
    %21 = arith.addf %18, %20 : vector<128x64xf32>
    %cst_16 = arith.constant 0.000000e+00 : f32
    %22 = vector.broadcast %cst_16 : f32 to vector<128x64xf32>
    %23 = arith.maximumf %21, %22 : vector<128x64xf32>
    %c0_17 = arith.constant 0 : index
    %c0_18 = arith.constant 0 : index
    %24 = vector.load %arg10[%c0_17, %c0_18] : memref<1x64xf32, #tpu.memory_space<vmem>>, vector<1x64xf32>
    %25 = vector.broadcast %24 : vector<1x64xf32> to vector<128x64xf32>
    %26 = arith.mulf %23, %25 : vector<128x64xf32>
    %c0_19 = arith.constant 0 : index
    %c0_20 = arith.constant 0 : index
    %27 = vector.load %arg11[%c0_19, %c0_20] : memref<1x64xf32, #tpu.memory_space<vmem>>, vector<1x64xf32>
    %28 = vector.broadcast %27 : vector<1x64xf32> to vector<128x64xf32>
    %29 = arith.addf %26, %28 : vector<128x64xf32>
    %c0_21 = arith.constant 0 : index
    %c0_22 = arith.constant 0 : index
    %30 = vector.load %arg12[%c0_21, %c0_22] : memref<64x32xf32, #tpu.memory_space<vmem>>, vector<64x32xf32>
    %cst_23 = arith.constant dense<0.000000e+00> : vector<128x32xf32>
    %31 = tpu.matmul %29, %30, %cst_23 {dimension_numbers = #tpu.dot_dimension_numbers<[1], [0], [0], [1], [0, 0, 1, 1], [], []>} : vector<128x64xf32>, vector<64x32xf32>, vector<128x32xf32> -> vector<128x32xf32>
    %c0_24 = arith.constant 0 : index
    %c0_25 = arith.constant 0 : index
    %32 = vector.load %arg13[%c0_24, %c0_25] : memref<1x32xf32, #tpu.memory_space<vmem>>, vector<1x32xf32>
    %33 = vector.broadcast %32 : vector<1x32xf32> to vector<128x32xf32>
    %34 = arith.addf %31, %33 : vector<128x32xf32>
    %cst_26 = arith.constant 0.000000e+00 : f32
    %35 = vector.broadcast %cst_26 : f32 to vector<128x32xf32>
    %36 = arith.maximumf %34, %35 : vector<128x32xf32>
    %c0_27 = arith.constant 0 : index
    %c0_28 = arith.constant 0 : index
    %37 = vector.load %arg14[%c0_27, %c0_28] : memref<1x32xf32, #tpu.memory_space<vmem>>, vector<1x32xf32>
    %38 = vector.broadcast %37 : vector<1x32xf32> to vector<128x32xf32>
    %39 = arith.mulf %36, %38 : vector<128x32xf32>
    %c0_29 = arith.constant 0 : index
    %c0_30 = arith.constant 0 : index
    %40 = vector.load %arg15[%c0_29, %c0_30] : memref<1x32xf32, #tpu.memory_space<vmem>>, vector<1x32xf32>
    %41 = vector.broadcast %40 : vector<1x32xf32> to vector<128x32xf32>
    %42 = arith.addf %39, %41 : vector<128x32xf32>
    %c0_31 = arith.constant 0 : index
    %c0_32 = arith.constant 0 : index
    %43 = vector.load %arg3[%c0_31, %c0_32] : memref<128x1xi32, #tpu.memory_space<vmem>>, vector<128x1xi32>
    %c2_i32 = arith.constant 2 : i32
    %44 = arith.muli %c2_i32, %arg0 : i32
    %45 = arith.index_cast %44 : i32 to index
    %46 = memref.load %arg1[%45] : memref<6xi32, #tpu.memory_space<smem>>
    %c2_i32_33 = arith.constant 2 : i32
    %47 = arith.muli %c2_i32_33, %arg0 : i32
    %c1_i32 = arith.constant 1 : i32
    %48 = arith.addi %47, %c1_i32 : i32
    %49 = arith.index_cast %48 : i32 to index
    %50 = memref.load %arg1[%49] : memref<6xi32, #tpu.memory_space<smem>>
    %c1_i32_34 = arith.constant 1 : i32
    %51 = arith.addi %50, %c1_i32_34 : i32
    %c0_i32_35 = arith.constant 0 : i32
    %cst_36 = arith.constant -3.000000e+38 : f32
    %52 = arith.subi %51, %46 : i32
    %53 = arith.addi %46, %52 : i32
    %c1_i32_37 = arith.constant 1 : i32
    scf.for %arg26 = %46 to %53 step %c1_i32_37  : i32 {
      %57 = vector.broadcast %arg26 : i32 to vector<128x1xi32>
      %58 = arith.cmpi eq, %43, %57 : vector<128x1xi32>
      %59 = vector.shape_cast %58 : vector<128x1xi1> to vector<128x1xi1>
      %60 = vector.broadcast %59 : vector<128x1xi1> to vector<128x32xi1>
      %61 = vector.broadcast %cst_36 : f32 to vector<128x32xf32>
      %62 = arith.select %60, %42, %61 : vector<128x32xi1>, vector<128x32xf32>
      %cst_40 = arith.constant dense<0xFF800000> : vector<32xf32>
      %63 = vector.multi_reduction <maximumf>, %62, %cst_40 [0] : vector<128x32xf32> to vector<32xf32>
      %64 = vector.shape_cast %63 : vector<32xf32> to vector<1x32xf32>
      %65 = arith.index_cast %arg26 : i32 to index
      %c0_41 = arith.constant 0 : index
      %66 = vector.load %arg25[%65, %c0_41] : memref<24x32xf32, #tpu.memory_space<vmem>>, vector<1x32xf32>
      %67 = arith.maximumf %66, %64 : vector<1x32xf32>
      %68 = arith.index_cast %arg26 : i32 to index
      %c0_42 = arith.constant 0 : index
      %69 = vector.load %arg25[%68, %c0_42] : memref<24x32xf32, #tpu.memory_space<vmem>>, vector<1x32xf32>
      tpu.vector_store %arg25[%68, %c0_42], %67 {strides = array<i32>} : memref<24x32xf32, #tpu.memory_space<vmem>>, vector<1x32xf32>,
    }
    %c2_i32_38 = arith.constant 2 : i32
    %54 = arith.cmpi eq, %arg0, %c2_i32_38 : i32
    %55 = arith.extui %54 : i1 to i32
    %c0_i32_39 = arith.constant 0 : i32
    %56 = arith.cmpi ne, %55, %c0_i32_39 : i32
    scf.if %56 {
      %c0_40 = arith.constant 0 : index
      %c0_41 = arith.constant 0 : index
      %57 = vector.load %arg25[%c0_40, %c0_41] : memref<24x32xf32, #tpu.memory_space<vmem>>, vector<24x32xf32>
      %c0_42 = arith.constant 0 : index
      %c0_43 = arith.constant 0 : index
      %58 = vector.load %arg16[%c0_42, %c0_43] : memref<32x32xf32, #tpu.memory_space<vmem>>, vector<32x32xf32>
      %cst_44 = arith.constant dense<0.000000e+00> : vector<24x32xf32>
      %59 = tpu.matmul %57, %58, %cst_44 {dimension_numbers = #tpu.dot_dimension_numbers<[1], [0], [0], [1], [0, 0, 1, 1], [], []>} : vector<24x32xf32>, vector<32x32xf32>, vector<24x32xf32> -> vector<24x32xf32>
      %c0_45 = arith.constant 0 : index
      %c0_46 = arith.constant 0 : index
      %60 = vector.load %arg17[%c0_45, %c0_46] : memref<1x32xf32, #tpu.memory_space<vmem>>, vector<1x32xf32>
      %61 = vector.broadcast %60 : vector<1x32xf32> to vector<24x32xf32>
      %62 = arith.addf %59, %61 : vector<24x32xf32>
      %cst_47 = arith.constant 0.000000e+00 : f32
      %63 = vector.broadcast %cst_47 : f32 to vector<24x32xf32>
      %64 = arith.maximumf %62, %63 : vector<24x32xf32>
      %c0_48 = arith.constant 0 : index
      %c0_49 = arith.constant 0 : index
      %65 = vector.load %arg18[%c0_48, %c0_49] : memref<1x32xf32, #tpu.memory_space<vmem>>, vector<1x32xf32>
      %66 = vector.broadcast %65 : vector<1x32xf32> to vector<24x32xf32>
      %67 = arith.mulf %64, %66 : vector<24x32xf32>
      %c0_50 = arith.constant 0 : index
      %c0_51 = arith.constant 0 : index
      %68 = vector.load %arg19[%c0_50, %c0_51] : memref<1x32xf32, #tpu.memory_space<vmem>>, vector<1x32xf32>
      %69 = vector.broadcast %68 : vector<1x32xf32> to vector<24x32xf32>
      %70 = arith.addf %67, %69 : vector<24x32xf32>
      %c0_52 = arith.constant 0 : index
      %c0_53 = arith.constant 0 : index
      %71 = vector.load %arg20[%c0_52, %c0_53] : memref<32x32xf32, #tpu.memory_space<vmem>>, vector<32x32xf32>
      %cst_54 = arith.constant dense<0.000000e+00> : vector<24x32xf32>
      %72 = tpu.matmul %70, %71, %cst_54 {dimension_numbers = #tpu.dot_dimension_numbers<[1], [0], [0], [1], [0, 0, 1, 1], [], []>} : vector<24x32xf32>, vector<32x32xf32>, vector<24x32xf32> -> vector<24x32xf32>
      %c0_55 = arith.constant 0 : index
      %c0_56 = arith.constant 0 : index
      %73 = vector.load %arg21[%c0_55, %c0_56] : memref<1x32xf32, #tpu.memory_space<vmem>>, vector<1x32xf32>
      %74 = vector.broadcast %73 : vector<1x32xf32> to vector<24x32xf32>
      %75 = arith.addf %72, %74 : vector<24x32xf32>
      %cst_57 = arith.constant 0.000000e+00 : f32
      %76 = vector.broadcast %cst_57 : f32 to vector<24x32xf32>
      %77 = arith.maximumf %75, %76 : vector<24x32xf32>
      %c0_58 = arith.constant 0 : index
      %c0_59 = arith.constant 0 : index
      %78 = vector.load %arg22[%c0_58, %c0_59] : memref<1x32xf32, #tpu.memory_space<vmem>>, vector<1x32xf32>
      %79 = vector.broadcast %78 : vector<1x32xf32> to vector<24x32xf32>
      %80 = arith.mulf %77, %79 : vector<24x32xf32>
      %c0_60 = arith.constant 0 : index
      %c0_61 = arith.constant 0 : index
      %81 = vector.load %arg23[%c0_60, %c0_61] : memref<1x32xf32, #tpu.memory_space<vmem>>, vector<1x32xf32>
      %82 = vector.broadcast %81 : vector<1x32xf32> to vector<24x32xf32>
      %83 = arith.addf %80, %82 : vector<24x32xf32>
      %c0_62 = arith.constant 0 : index
      %c0_63 = arith.constant 0 : index
      %84 = vector.load %arg24[%c0_62, %c0_63] : memref<24x32xf32, #tpu.memory_space<vmem>>, vector<24x32xf32>
      tpu.vector_store %arg24[%c0_62, %c0_63], %83 {strides = array<i32>} : memref<24x32xf32, #tpu.memory_space<vmem>>, vector<24x32xf32>,
    } else {
    }
    return
  }
  func.func @transform_0(%arg0: i32, %arg1: memref<6xi32, #tpu.memory_space<smem>>) -> (i32, i32) {
    %c0_i32 = arith.constant 0 : i32
    %c0_i32_0 = arith.constant 0 : i32
    return %arg0, %c0_i32 : i32, i32
  }
  func.func @transform_1(%arg0: i32, %arg1: memref<6xi32, #tpu.memory_space<smem>>) -> (i32, i32) {
    %c0_i32 = arith.constant 0 : i32
    %c0_i32_0 = arith.constant 0 : i32
    return %arg0, %c0_i32 : i32, i32
  }
  func.func @transform_2(%arg0: i32, %arg1: memref<6xi32, #tpu.memory_space<smem>>) -> (i32, i32) {
    %c0_i32 = arith.constant 0 : i32
    %c0_i32_0 = arith.constant 0 : i32
    %c0_i32_1 = arith.constant 0 : i32
    return %c0_i32, %c0_i32_0 : i32, i32
  }
  func.func @transform_3(%arg0: i32, %arg1: memref<6xi32, #tpu.memory_space<smem>>) -> (i32, i32) {
    %c0_i32 = arith.constant 0 : i32
    %c0_i32_0 = arith.constant 0 : i32
    %c0_i32_1 = arith.constant 0 : i32
    return %c0_i32, %c0_i32_0 : i32, i32
  }
  func.func @transform_4(%arg0: i32, %arg1: memref<6xi32, #tpu.memory_space<smem>>) -> (i32, i32) {
    %c0_i32 = arith.constant 0 : i32
    %c0_i32_0 = arith.constant 0 : i32
    %c0_i32_1 = arith.constant 0 : i32
    return %c0_i32, %c0_i32_0 : i32, i32
  }
  func.func @transform_5(%arg0: i32, %arg1: memref<6xi32, #tpu.memory_space<smem>>) -> (i32, i32) {
    %c0_i32 = arith.constant 0 : i32
    %c0_i32_0 = arith.constant 0 : i32
    %c0_i32_1 = arith.constant 0 : i32
    return %c0_i32, %c0_i32_0 : i32, i32
  }
  func.func @transform_6(%arg0: i32, %arg1: memref<6xi32, #tpu.memory_space<smem>>) -> (i32, i32) {
    %c0_i32 = arith.constant 0 : i32
    %c0_i32_0 = arith.constant 0 : i32
    %c0_i32_1 = arith.constant 0 : i32
    return %c0_i32, %c0_i32_0 : i32, i32
  }
  func.func @transform_7(%arg0: i32, %arg1: memref<6xi32, #tpu.memory_space<smem>>) -> (i32, i32) {
    %c0_i32 = arith.constant 0 : i32
    %c0_i32_0 = arith.constant 0 : i32
    %c0_i32_1 = arith.constant 0 : i32
    return %c0_i32, %c0_i32_0 : i32, i32
  }
  func.func @transform_8(%arg0: i32, %arg1: memref<6xi32, #tpu.memory_space<smem>>) -> (i32, i32) {
    %c0_i32 = arith.constant 0 : i32
    %c0_i32_0 = arith.constant 0 : i32
    %c0_i32_1 = arith.constant 0 : i32
    return %c0_i32, %c0_i32_0 : i32, i32
  }
  func.func @transform_9(%arg0: i32, %arg1: memref<6xi32, #tpu.memory_space<smem>>) -> (i32, i32) {
    %c0_i32 = arith.constant 0 : i32
    %c0_i32_0 = arith.constant 0 : i32
    %c0_i32_1 = arith.constant 0 : i32
    return %c0_i32, %c0_i32_0 : i32, i32
  }
  func.func @transform_10(%arg0: i32, %arg1: memref<6xi32, #tpu.memory_space<smem>>) -> (i32, i32) {
    %c0_i32 = arith.constant 0 : i32
    %c0_i32_0 = arith.constant 0 : i32
    %c0_i32_1 = arith.constant 0 : i32
    return %c0_i32, %c0_i32_0 : i32, i32
  }
  func.func @transform_11(%arg0: i32, %arg1: memref<6xi32, #tpu.memory_space<smem>>) -> (i32, i32) {
    %c0_i32 = arith.constant 0 : i32
    %c0_i32_0 = arith.constant 0 : i32
    %c0_i32_1 = arith.constant 0 : i32
    return %c0_i32, %c0_i32_0 : i32, i32
  }
  func.func @transform_12(%arg0: i32, %arg1: memref<6xi32, #tpu.memory_space<smem>>) -> (i32, i32) {
    %c0_i32 = arith.constant 0 : i32
    %c0_i32_0 = arith.constant 0 : i32
    %c0_i32_1 = arith.constant 0 : i32
    return %c0_i32, %c0_i32_0 : i32, i32
  }
  func.func @transform_13(%arg0: i32, %arg1: memref<6xi32, #tpu.memory_space<smem>>) -> (i32, i32) {
    %c0_i32 = arith.constant 0 : i32
    %c0_i32_0 = arith.constant 0 : i32
    %c0_i32_1 = arith.constant 0 : i32
    return %c0_i32, %c0_i32_0 : i32, i32
  }
  func.func @transform_14(%arg0: i32, %arg1: memref<6xi32, #tpu.memory_space<smem>>) -> (i32, i32) {
    %c0_i32 = arith.constant 0 : i32
    %c0_i32_0 = arith.constant 0 : i32
    %c0_i32_1 = arith.constant 0 : i32
    return %c0_i32, %c0_i32_0 : i32, i32
  }
  func.func @transform_15(%arg0: i32, %arg1: memref<6xi32, #tpu.memory_space<smem>>) -> (i32, i32) {
    %c0_i32 = arith.constant 0 : i32
    %c0_i32_0 = arith.constant 0 : i32
    %c0_i32_1 = arith.constant 0 : i32
    return %c0_i32, %c0_i32_0 : i32, i32
  }
  func.func @transform_16(%arg0: i32, %arg1: memref<6xi32, #tpu.memory_space<smem>>) -> (i32, i32) {
    %c0_i32 = arith.constant 0 : i32
    %c0_i32_0 = arith.constant 0 : i32
    %c0_i32_1 = arith.constant 0 : i32
    return %c0_i32, %c0_i32_0 : i32, i32
  }
  func.func @transform_17(%arg0: i32, %arg1: memref<6xi32, #tpu.memory_space<smem>>) -> (i32, i32) {
    %c0_i32 = arith.constant 0 : i32
    %c0_i32_0 = arith.constant 0 : i32
    %c0_i32_1 = arith.constant 0 : i32
    return %c0_i32, %c0_i32_0 : i32, i32
  }
  func.func @transform_18(%arg0: i32, %arg1: memref<6xi32, #tpu.memory_space<smem>>) -> (i32, i32) {
    %c0_i32 = arith.constant 0 : i32
    %c0_i32_0 = arith.constant 0 : i32
    %c0_i32_1 = arith.constant 0 : i32
    return %c0_i32, %c0_i32_0 : i32, i32
  }
  func.func @transform_19(%arg0: i32, %arg1: memref<6xi32, #tpu.memory_space<smem>>) -> (i32, i32) {
    %c0_i32 = arith.constant 0 : i32
    %c0_i32_0 = arith.constant 0 : i32
    %c0_i32_1 = arith.constant 0 : i32
    return %c0_i32, %c0_i32_0 : i32, i32
  }
  func.func @transform_20(%arg0: i32, %arg1: memref<6xi32, #tpu.memory_space<smem>>) -> (i32, i32) {
    %c0_i32 = arith.constant 0 : i32
    %c0_i32_0 = arith.constant 0 : i32
    %c0_i32_1 = arith.constant 0 : i32
    return %c0_i32, %c0_i32_0 : i32, i32
  }
  func.func @transform_21(%arg0: i32, %arg1: memref<6xi32, #tpu.memory_space<smem>>) -> (i32, i32) {
    %c0_i32 = arith.constant 0 : i32
    %c0_i32_0 = arith.constant 0 : i32
    %c0_i32_1 = arith.constant 0 : i32
    return %c0_i32, %c0_i32_0 : i32, i32
  }
  func.func @transform_22(%arg0: i32, %arg1: memref<6xi32, #tpu.memory_space<smem>>) -> (i32, i32) {
    %c0_i32 = arith.constant 0 : i32
    %c0_i32_0 = arith.constant 0 : i32
    %c0_i32_1 = arith.constant 0 : i32
    return %c0_i32, %c0_i32_0 : i32, i32
  }
}

</mosaic_0001>

<llo_original>
// kernel: tpu_custom_call.1
$region0: #{tpu_custom_call.1}
  #allocation0 [shape = 'u32[]', space=smem, size = 0x4, offset = 0x4, fixed_abs, tag = 'smem constant byte address 0x4 - core index']
  #allocation1 [shape = 'u32[72,128]{1,0:T(1,128)}', space=vmem, size = 0x9000, scoped, tag = 'internal scratch']
  #allocation2 [shape = 'f32[24,32]{1,0:T(8,128)}', space=vmem, size = 0x3000, scoped, tag = 'scratch operand']
  #allocation3 [shape = 's32[1]{0}', space=sflag, size = 0x4, scoped, tag = 'scoped memory for tpu_custom_call.1']
  #allocation4 [shape = 'u8[512]{0}', space=smem, size = 0x200, scoped, tag = 'prefetched SMEM operand 0']
  %s0 = inlined_call_operand.vmem [shape: s32[6], index: 0, kind: input, shape index: {}]
  %s1 = inlined_call_operand.vmem [shape: f32[384,35], index: 1, kind: input, shape index: {}]
  %s2 = inlined_call_operand.vmem [shape: s32[384,1], index: 2, kind: input, shape index: {}]
  %s3 = inlined_call_operand.vmem [shape: f32[35,64], index: 3, kind: input, shape index: {}]
  %s4 = inlined_call_operand.vmem [shape: f32[1,64], index: 4, kind: input, shape index: {}]
  %s5 = inlined_call_operand.vmem [shape: f32[1,64], index: 5, kind: input, shape index: {}]
  %s6 = inlined_call_operand.vmem [shape: f32[1,64], index: 6, kind: input, shape index: {}]
  %s7 = inlined_call_operand.vmem [shape: f32[64,64], index: 7, kind: input, shape index: {}]
  %s8 = inlined_call_operand.vmem [shape: f32[1,64], index: 8, kind: input, shape index: {}]
  %s9 = inlined_call_operand.vmem [shape: f32[1,64], index: 9, kind: input, shape index: {}]
  %s10 = inlined_call_operand.vmem [shape: f32[1,64], index: 10, kind: input, shape index: {}]
  %s11 = inlined_call_operand.vmem [shape: f32[64,32], index: 11, kind: input, shape index: {}]
  %s12 = inlined_call_operand.vmem [shape: f32[1,32], index: 12, kind: input, shape index: {}]
  %s13 = inlined_call_operand.vmem [shape: f32[1,32], index: 13, kind: input, shape index: {}]
  %s14 = inlined_call_operand.vmem [shape: f32[1,32], index: 14, kind: input, shape index: {}]
  %s15 = inlined_call_operand.vmem [shape: f32[32,32], index: 15, kind: input, shape index: {}]
  %s16 = inlined_call_operand.vmem [shape: f32[1,32], index: 16, kind: input, shape index: {}]
  %s17 = inlined_call_operand.vmem [shape: f32[1,32], index: 17, kind: input, shape index: {}]
  %s18 = inlined_call_operand.vmem [shape: f32[1,32], index: 18, kind: input, shape index: {}]
  %s19 = inlined_call_operand.vmem [shape: f32[32,32], index: 19, kind: input, shape index: {}]
  %s20 = inlined_call_operand.vmem [shape: f32[1,32], index: 20, kind: input, shape index: {}]
  %s21 = inlined_call_operand.vmem [shape: f32[1,32], index: 21, kind: input, shape index: {}]
  %s22 = inlined_call_operand.vmem [shape: f32[1,32], index: 22, kind: input, shape index: {}]
  %s23 = inlined_call_operand.hbm [shape: f32[24,32], index: 23, kind: output, shape index: {}]
  %s24 = sld [smem:[#allocation0]]
  $region136: #{tpu_custom_call.1} parent=0
    _
  %s26 = ssub.s32 1, %s24
  %s27 = scalar_select 0, %s26, %s24
  %s29 = sshll.u32 %s0, 4
  %s30 = int_to_ptr.vmem [resolvable:$true] %s29
  %32 = dma.vmem_to_smem %s30, 16, [#allocation4], [#allocation3]
  %34 = dma.done [#allocation3], 16
  %35 = sfence
  $region1: #{tpu_custom_call.1} parent=0
    #allocation5 [shape = 'u8[12288]{0}', space=vmem, size = 0x3000, scoped, tag = 'output window, operand 0, single buffered']
    #allocation6 [shape = 's32[2]{0}', space=sflag, size = 0x8, scoped, tag = 'scoped memory for tpu_custom_call.1']
    %36 = vsyncpa [#allocation6], 0
    loop: start=0, step=1, limit=5
    $region2: #{tpu_custom_call.1} parent=1 // loop_pre_header
      _
    $region3: #{tpu_custom_call.1} parent=1 // loop_header
      %s38 = sphi 0, %s42
      %p39 = scmp.ge.s32.totalorder %s38, 5
      %s48 = sphi 0, %s50
      %s51 = sphi 0, %s48
      %s52 = sphi 0, %s51
      %s68 = sphi 0, %s52
      %s74 = sphi 0, %s76
      %s77 = sphi 0, %s74
      %s78 = sphi 0, %s77
      %s94 = sphi 0, %s78
      %s98 = sphi 0, %s98
      %s100 = sphi 0, %s98
      %s101 = sphi 0, %s100
      %s115 = sphi 0, %s101
      %s119 = sphi 0, %s119
      %s121 = sphi 0, %s119
      %s122 = sphi 0, %s121
      %s136 = sphi 0, %s122
      %s140 = sphi 0, %s140
      %s142 = sphi 0, %s140
      %s143 = sphi 0, %s142
      %s157 = sphi 0, %s143
      %s161 = sphi 0, %s161
      %s163 = sphi 0, %s161
      %s164 = sphi 0, %s163
      %s178 = sphi 0, %s164
      %s182 = sphi 0, %s182
      %s184 = sphi 0, %s182
      %s185 = sphi 0, %s184
      %s199 = sphi 0, %s185
      %s203 = sphi 0, %s203
      %s205 = sphi 0, %s203
      %s206 = sphi 0, %s205
      %s220 = sphi 0, %s206
      %s224 = sphi 0, %s224
      %s226 = sphi 0, %s224
      %s227 = sphi 0, %s226
      %s241 = sphi 0, %s227
      %s245 = sphi 0, %s245
      %s247 = sphi 0, %s245
      %s248 = sphi 0, %s247
      %s262 = sphi 0, %s248
      %s266 = sphi 0, %s266
      %s268 = sphi 0, %s266
      %s269 = sphi 0, %s268
      %s283 = sphi 0, %s269
      %s287 = sphi 0, %s287
      %s289 = sphi 0, %s287
      %s290 = sphi 0, %s289
      %s304 = sphi 0, %s290
      %s308 = sphi 0, %s308
      %s310 = sphi 0, %s308
      %s311 = sphi 0, %s310
      %s325 = sphi 0, %s311
      %s329 = sphi 0, %s329
      %s331 = sphi 0, %s329
      %s332 = sphi 0, %s331
      %s346 = sphi 0, %s332
      %s350 = sphi 0, %s350
      %s352 = sphi 0, %s350
      %s353 = sphi 0, %s352
      %s367 = sphi 0, %s353
      %s371 = sphi 0, %s371
      %s373 = sphi 0, %s371
      %s374 = sphi 0, %s373
      %s388 = sphi 0, %s374
      %s392 = sphi 0, %s392
      %s394 = sphi 0, %s392
      %s395 = sphi 0, %s394
      %s409 = sphi 0, %s395
      %s413 = sphi 0, %s413
      %s415 = sphi 0, %s413
      %s416 = sphi 0, %s415
      %s430 = sphi 0, %s416
      %s434 = sphi 0, %s434
      %s436 = sphi 0, %s434
      %s437 = sphi 0, %s436
      %s451 = sphi 0, %s437
      %s455 = sphi 0, %s455
      %s457 = sphi 0, %s455
      %s458 = sphi 0, %s457
      %s472 = sphi 0, %s458
      %s476 = sphi 0, %s476
      %s478 = sphi 0, %s476
      %s479 = sphi 0, %s478
      %s493 = sphi 0, %s479
      %s497 = sphi 0, %s497
      %s499 = sphi 0, %s497
      %s500 = sphi 0, %s499
      %s514 = sphi 0, %s500
      %s518 = sphi 0, %s518
      %s520 = sphi 0, %s518
      %s521 = sphi 0, %s520
      %s535 = sphi 0, %s521
    $region4: #{tpu_custom_call.1} parent=1 // loop_header_branch
      %41 = sbr.rel (%p39) target = $region8
    $region5: #{tpu_custom_call.1} parent=1 // loop_body
      %s43 = ssub.s32 %s38, 1
      %s44 = ssub.s32 %s38, 2
      %s45 = sadd.s32 %s38, 1
      %s46 = ssub.s32 %s38, %s45
      %p47 = scmp.eq.s32.totalorder %s46, 0
      %s49 = sadd.s32 %s48, 1
      %s50 = scalar_select %p47, %s48, %s49
      %p53 = pneg %p47
      %p54 = scmp.eq.s32.totalorder %s38, 2
      %p55 = por %p53, %p54
      %p56 = scmp.ne.s32.totalorder %s48, %s51
      %p57 = scmp.eq.s32.totalorder %s38, 0
      %p58 = por %p56, %p57
      %p59 = scmp.ne.s32.totalorder %s48, %s51
      %p60 = scmp.eq.s32.totalorder %s43, 2
      %p61 = por %p59, %p60
      %p62 = scmp.ne.s32.totalorder %s51, %s52
      %p63 = scmp.eq.s32.totalorder %s43, 0
      %p64 = por %p62, %p63
      %p65 = scmp.ne.s32.totalorder %s51, %s52
      %p66 = scmp.eq.s32.totalorder %s44, 2
      %p67 = por %p65, %p66
      %p69 = scmp.ne.s32.totalorder %s52, %s68
      %p70 = scmp.eq.s32.totalorder %s44, 0
      %p71 = por %p69, %p70
      %s72 = ssub.s32 %s38, %s45
      %p73 = scmp.eq.s32.totalorder %s72, 0
      %s75 = sadd.s32 %s74, 1
      %s76 = scalar_select %p73, %s74, %s75
      %p79 = pneg %p73
      %p80 = scmp.eq.s32.totalorder %s38, 2
      %p81 = por %p79, %p80
      %p82 = scmp.ne.s32.totalorder %s74, %s77
      %p83 = scmp.eq.s32.totalorder %s38, 0
      %p84 = por %p82, %p83
      %p85 = scmp.ne.s32.totalorder %s74, %s77
      %p86 = scmp.eq.s32.totalorder %s43, 2
      %p87 = por %p85, %p86
      %p88 = scmp.ne.s32.totalorder %s77, %s78
      %p89 = scmp.eq.s32.totalorder %s43, 0
      %p90 = por %p88, %p89
      %p91 = scmp.ne.s32.totalorder %s77, %s78
      %p92 = scmp.eq.s32.totalorder %s44, 2
      %p93 = por %p91, %p92
      %p95 = scmp.ne.s32.totalorder %s78, %s94
      %p96 = scmp.eq.s32.totalorder %s44, 0
      %p97 = por %p95, %p96
      %s99 = sadd.s32 %s98, 1
      %p102 = scmp.eq.s32.totalorder %s38, 2
      %p103 = scmp.ne.s32.totalorder %s98, %s100
      %p104 = scmp.eq.s32.totalorder %s38, 0
      %p105 = por %p103, %p104
      %p106 = scmp.ne.s32.totalorder %s98, %s100
      %p107 = scmp.eq.s32.totalorder %s43, 2
      %p108 = por %p106, %p107
      %p109 = scmp.ne.s32.totalorder %s100, %s101
      %p110 = scmp.eq.s32.totalorder %s43, 0
      %p111 = por %p109, %p110
      %p112 = scmp.ne.s32.totalorder %s100, %s101
      %p113 = scmp.eq.s32.totalorder %s44, 2
      %p114 = por %p112, %p113
      %p116 = scmp.ne.s32.totalorder %s101, %s115
      %p117 = scmp.eq.s32.totalorder %s44, 0
      %p118 = por %p116, %p117
      %s120 = sadd.s32 %s119, 1
      %p123 = scmp.eq.s32.totalorder %s38, 2
      %p124 = scmp.ne.s32.totalorder %s119, %s121
      %p125 = scmp.eq.s32.totalorder %s38, 0
      %p126 = por %p124, %p125
      %p127 = scmp.ne.s32.totalorder %s119, %s121
      %p128 = scmp.eq.s32.totalorder %s43, 2
      %p129 = por %p127, %p128
      %p130 = scmp.ne.s32.totalorder %s121, %s122
      %p131 = scmp.eq.s32.totalorder %s43, 0
      %p132 = por %p130, %p131
      %p133 = scmp.ne.s32.totalorder %s121, %s122
      %p134 = scmp.eq.s32.totalorder %s44, 2
      %p135 = por %p133, %p134
      %p137 = scmp.ne.s32.totalorder %s122, %s136
      %p138 = scmp.eq.s32.totalorder %s44, 0
      %p139 = por %p137, %p138
      %s141 = sadd.s32 %s140, 1
      %p144 = scmp.eq.s32.totalorder %s38, 2
      %p145 = scmp.ne.s32.totalorder %s140, %s142
      %p146 = scmp.eq.s32.totalorder %s38, 0
      %p147 = por %p145, %p146
      %p148 = scmp.ne.s32.totalorder %s140, %s142
      %p149 = scmp.eq.s32.totalorder %s43, 2
      %p150 = por %p148, %p149
      %p151 = scmp.ne.s32.totalorder %s142, %s143
      %p152 = scmp.eq.s32.totalorder %s43, 0
      %p153 = por %p151, %p152
      %p154 = scmp.ne.s32.totalorder %s142, %s143
      %p155 = scmp.eq.s32.totalorder %s44, 2
      %p156 = por %p154, %p155
      %p158 = scmp.ne.s32.totalorder %s143, %s157
      %p159 = scmp.eq.s32.totalorder %s44, 0
      %p160 = por %p158, %p159
      %s162 = sadd.s32 %s161, 1
      %p165 = scmp.eq.s32.totalorder %s38, 2
      %p166 = scmp.ne.s32.totalorder %s161, %s163
      %p167 = scmp.eq.s32.totalorder %s38, 0
      %p168 = por %p166, %p167
      %p169 = scmp.ne.s32.totalorder %s161, %s163
      %p170 = scmp.eq.s32.totalorder %s43, 2
      %p171 = por %p169, %p170
      %p172 = scmp.ne.s32.totalorder %s163, %s164
      %p173 = scmp.eq.s32.totalorder %s43, 0
      %p174 = por %p172, %p173
      %p175 = scmp.ne.s32.totalorder %s163, %s164
      %p176 = scmp.eq.s32.totalorder %s44, 2
      %p177 = por %p175, %p176
      %p179 = scmp.ne.s32.totalorder %s164, %s178
      %p180 = scmp.eq.s32.totalorder %s44, 0
      %p181 = por %p179, %p180
      %s183 = sadd.s32 %s182, 1
      %p186 = scmp.eq.s32.totalorder %s38, 2
      %p187 = scmp.ne.s32.totalorder %s182, %s184
      %p188 = scmp.eq.s32.totalorder %s38, 0
      %p189 = por %p187, %p188
      %p190 = scmp.ne.s32.totalorder %s182, %s184
      %p191 = scmp.eq.s32.totalorder %s43, 2
      %p192 = por %p190, %p191
      %p193 = scmp.ne.s32.totalorder %s184, %s185
      %p194 = scmp.eq.s32.totalorder %s43, 0
      %p195 = por %p193, %p194
      %p196 = scmp.ne.s32.totalorder %s184, %s185
      %p197 = scmp.eq.s32.totalorder %s44, 2
      %p198 = por %p196, %p197
      %p200 = scmp.ne.s32.totalorder %s185, %s199
      %p201 = scmp.eq.s32.totalorder %s44, 0
      %p202 = por %p200, %p201
      %s204 = sadd.s32 %s203, 1
      %p207 = scmp.eq.s32.totalorder %s38, 2
      %p208 = scmp.ne.s32.totalorder %s203, %s205
      %p209 = scmp.eq.s32.totalorder %s38, 0
      %p210 = por %p208, %p209
      %p211 = scmp.ne.s32.totalorder %s203, %s205
      %p212 = scmp.eq.s32.totalorder %s43, 2
      %p213 = por %p211, %p212
      %p214 = scmp.ne.s32.totalorder %s205, %s206
      %p215 = scmp.eq.s32.totalorder %s43, 0
      %p216 = por %p214, %p215
      %p217 = scmp.ne.s32.totalorder %s205, %s206
      %p218 = scmp.eq.s32.totalorder %s44, 2
      %p219 = por %p217, %p218
      %p221 = scmp.ne.s32.totalorder %s206, %s220
      %p222 = scmp.eq.s32.totalorder %s44, 0
      %p223 = por %p221, %p222
      %s225 = sadd.s32 %s224, 1
      %p228 = scmp.eq.s32.totalorder %s38, 2
      %p229 = scmp.ne.s32.totalorder %s224, %s226
      %p230 = scmp.eq.s32.totalorder %s38, 0
      %p231 = por %p229, %p230
      %p232 = scmp.ne.s32.totalorder %s224, %s226
      %p233 = scmp.eq.s32.totalorder %s43, 2
      %p234 = por %p232, %p233
      %p235 = scmp.ne.s32.totalorder %s226, %s227
      %p236 = scmp.eq.s32.totalorder %s43, 0
      %p237 = por %p235, %p236
      %p238 = scmp.ne.s32.totalorder %s226, %s227
      %p239 = scmp.eq.s32.totalorder %s44, 2
      %p240 = por %p238, %p239
      %p242 = scmp.ne.s32.totalorder %s227, %s241
      %p243 = scmp.eq.s32.totalorder %s44, 0
      %p244 = por %p242, %p243
      %s246 = sadd.s32 %s245, 1
      %p249 = scmp.eq.s32.totalorder %s38, 2
      %p250 = scmp.ne.s32.totalorder %s245, %s247
      %p251 = scmp.eq.s32.totalorder %s38, 0
      %p252 = por %p250, %p251
      %p253 = scmp.ne.s32.totalorder %s245, %s247
      %p254 = scmp.eq.s32.totalorder %s43, 2
      %p255 = por %p253, %p254
      %p256 = scmp.ne.s32.totalorder %s247, %s248
      %p257 = scmp.eq.s32.totalorder %s43, 0
      %p258 = por %p256, %p257
      %p259 = scmp.ne.s32.totalorder %s247, %s248
      %p260 = scmp.eq.s32.totalorder %s44, 2
      %p261 = por %p259, %p260
      %p263 = scmp.ne.s32.totalorder %s248, %s262
      %p264 = scmp.eq.s32.totalorder %s44, 0
      %p265 = por %p263, %p264
      %s267 = sadd.s32 %s266, 1
      %p270 = scmp.eq.s32.totalorder %s38, 2
      %p271 = scmp.ne.s32.totalorder %s266, %s268
      %p272 = scmp.eq.s32.totalorder %s38, 0
      %p273 = por %p271, %p272
      %p274 = scmp.ne.s32.totalorder %s266, %s268
      %p275 = scmp.eq.s32.totalorder %s43, 2
      %p276 = por %p274, %p275
      %p277 = scmp.ne.s32.totalorder %s268, %s269
      %p278 = scmp.eq.s32.totalorder %s43, 0
      %p279 = por %p277, %p278
      %p280 = scmp.ne.s32.totalorder %s268, %s269
      %p281 = scmp.eq.s32.totalorder %s44, 2
      %p282 = por %p280, %p281
      %p284 = scmp.ne.s32.totalorder %s269, %s283
      %p285 = scmp.eq.s32.totalorder %s44, 0
      %p286 = por %p284, %p285
      %s288 = sadd.s32 %s287, 1
      %p291 = scmp.eq.s32.totalorder %s38, 2
      %p292 = scmp.ne.s32.totalorder %s287, %s289
      %p293 = scmp.eq.s32.totalorder %s38, 0
      %p294 = por %p292, %p293
      %p295 = scmp.ne.s32.totalorder %s287, %s289
      %p296 = scmp.eq.s32.totalorder %s43, 2
      %p297 = por %p295, %p296
      %p298 = scmp.ne.s32.totalorder %s289, %s290
      %p299 = scmp.eq.s32.totalorder %s43, 0
      %p300 = por %p298, %p299
      %p301 = scmp.ne.s32.totalorder %s289, %s290
      %p302 = scmp.eq.s32.totalorder %s44, 2
      %p303 = por %p301, %p302
      %p305 = scmp.ne.s32.totalorder %s290, %s304
      %p306 = scmp.eq.s32.totalorder %s44, 0
      %p307 = por %p305, %p306
      %s309 = sadd.s32 %s308, 1
      %p312 = scmp.eq.s32.totalorder %s38, 2
      %p313 = scmp.ne.s32.totalorder %s308, %s310
      %p314 = scmp.eq.s32.totalorder %s38, 0
      %p315 = por %p313, %p314
      %p316 = scmp.ne.s32.totalorder %s308, %s310
      %p317 = scmp.eq.s32.totalorder %s43, 2
      %p318 = por %p316, %p317
      %p319 = scmp.ne.s32.totalorder %s310, %s311
      %p320 = scmp.eq.s32.totalorder %s43, 0
      %p321 = por %p319, %p320
      %p322 = scmp.ne.s32.totalorder %s310, %s311
      %p323 = scmp.eq.s32.totalorder %s44, 2
      %p324 = por %p322, %p323
      %p326 = scmp.ne.s32.totalorder %s311, %s325
      %p327 = scmp.eq.s32.totalorder %s44, 0
      %p328 = por %p326, %p327
      %s330 = sadd.s32 %s329, 1
      %p333 = scmp.eq.s32.totalorder %s38, 2
      %p334 = scmp.ne.s32.totalorder %s329, %s331
      %p335 = scmp.eq.s32.totalorder %s38, 0
      %p336 = por %p334, %p335
      %p337 = scmp.ne.s32.totalorder %s329, %s331
      %p338 = scmp.eq.s32.totalorder %s43, 2
      %p339 = por %p337, %p338
      %p340 = scmp.ne.s32.totalorder %s331, %s332
      %p341 = scmp.eq.s32.totalorder %s43, 0
      %p342 = por %p340, %p341
      %p343 = scmp.ne.s32.totalorder %s331, %s332
      %p344 = scmp.eq.s32.totalorder %s44, 2
      %p345 = por %p343, %p344
      %p347 = scmp.ne.s32.totalorder %s332, %s346
      %p348 = scmp.eq.s32.totalorder %s44, 0
      %p349 = por %p347, %p348
      %s351 = sadd.s32 %s350, 1
      %p354 = scmp.eq.s32.totalorder %s38, 2
      %p355 = scmp.ne.s32.totalorder %s350, %s352
      %p356 = scmp.eq.s32.totalorder %s38, 0
      %p357 = por %p355, %p356
      %p358 = scmp.ne.s32.totalorder %s350, %s352
      %p359 = scmp.eq.s32.totalorder %s43, 2
      %p360 = por %p358, %p359
      %p361 = scmp.ne.s32.totalorder %s352, %s353
      %p362 = scmp.eq.s32.totalorder %s43, 0
      %p363 = por %p361, %p362
      %p364 = scmp.ne.s32.totalorder %s352, %s353
      %p365 = scmp.eq.s32.totalorder %s44, 2
      %p366 = por %p364, %p365
      %p368 = scmp.ne.s32.totalorder %s353, %s367
      %p369 = scmp.eq.s32.totalorder %s44, 0
      %p370 = por %p368, %p369
      %s372 = sadd.s32 %s371, 1
      %p375 = scmp.eq.s32.totalorder %s38, 2
      %p376 = scmp.ne.s32.totalorder %s371, %s373
      %p377 = scmp.eq.s32.totalorder %s38, 0
      %p378 = por %p376, %p377
      %p379 = scmp.ne.s32.totalorder %s371, %s373
      %p380 = scmp.eq.s32.totalorder %s43, 2
      %p381 = por %p379, %p380
      %p382 = scmp.ne.s32.totalorder %s373, %s374
      %p383 = scmp.eq.s32.totalorder %s43, 0
      %p384 = por %p382, %p383
      %p385 = scmp.ne.s32.totalorder %s373, %s374
      %p386 = scmp.eq.s32.totalorder %s44, 2
      %p387 = por %p385, %p386
      %p389 = scmp.ne.s32.totalorder %s374, %s388
      %p390 = scmp.eq.s32.totalorder %s44, 0
      %p391 = por %p389, %p390
      %s393 = sadd.s32 %s392, 1
      %p396 = scmp.eq.s32.totalorder %s38, 2
      %p397 = scmp.ne.s32.totalorder %s392, %s394
      %p398 = scmp.eq.s32.totalorder %s38, 0
      %p399 = por %p397, %p398
      %p400 = scmp.ne.s32.totalorder %s392, %s394
      %p401 = scmp.eq.s32.totalorder %s43, 2
      %p402 = por %p400, %p401
      %p403 = scmp.ne.s32.totalorder %s394, %s395
      %p404 = scmp.eq.s32.totalorder %s43, 0
      %p405 = por %p403, %p404
      %p406 = scmp.ne.s32.totalorder %s394, %s395
      %p407 = scmp.eq.s32.totalorder %s44, 2
      %p408 = por %p406, %p407
      %p410 = scmp.ne.s32.totalorder %s395, %s409
      %p411 = scmp.eq.s32.totalorder %s44, 0
      %p412 = por %p410, %p411
      %s414 = sadd.s32 %s413, 1
      %p417 = scmp.eq.s32.totalorder %s38, 2
      %p418 = scmp.ne.s32.totalorder %s413, %s415
      %p419 = scmp.eq.s32.totalorder %s38, 0
      %p420 = por %p418, %p419
      %p421 = scmp.ne.s32.totalorder %s413, %s415
      %p422 = scmp.eq.s32.totalorder %s43, 2
      %p423 = por %p421, %p422
      %p424 = scmp.ne.s32.totalorder %s415, %s416
      %p425 = scmp.eq.s32.totalorder %s43, 0
      %p426 = por %p424, %p425
      %p427 = scmp.ne.s32.totalorder %s415, %s416
      %p428 = scmp.eq.s32.totalorder %s44, 2
      %p429 = por %p427, %p428
      %p431 = scmp.ne.s32.totalorder %s416, %s430
      %p432 = scmp.eq.s32.totalorder %s44, 0
      %p433 = por %p431, %p432
      %s435 = sadd.s32 %s434, 1
      %p438 = scmp.eq.s32.totalorder %s38, 2
      %p439 = scmp.ne.s32.totalorder %s434, %s436
      %p440 = scmp.eq.s32.totalorder %s38, 0
      %p441 = por %p439, %p440
      %p442 = scmp.ne.s32.totalorder %s434, %s436
      %p443 = scmp.eq.s32.totalorder %s43, 2
      %p444 = por %p442, %p443
      %p445 = scmp.ne.s32.totalorder %s436, %s437
      %p446 = scmp.eq.s32.totalorder %s43, 0
      %p447 = por %p445, %p446
      %p448 = scmp.ne.s32.totalorder %s436, %s437
      %p449 = scmp.eq.s32.totalorder %s44, 2
      %p450 = por %p448, %p449
      %p452 = scmp.ne.s32.totalorder %s437, %s451
      %p453 = scmp.eq.s32.totalorder %s44, 0
      %p454 = por %p452, %p453
      %s456 = sadd.s32 %s455, 1
      %p459 = scmp.eq.s32.totalorder %s38, 2
      %p460 = scmp.ne.s32.totalorder %s455, %s457
      %p461 = scmp.eq.s32.totalorder %s38, 0
      %p462 = por %p460, %p461
      %p463 = scmp.ne.s32.totalorder %s455, %s457
      %p464 = scmp.eq.s32.totalorder %s43, 2
      %p465 = por %p463, %p464
      %p466 = scmp.ne.s32.totalorder %s457, %s458
      %p467 = scmp.eq.s32.totalorder %s43, 0
      %p468 = por %p466, %p467
      %p469 = scmp.ne.s32.totalorder %s457, %s458
      %p470 = scmp.eq.s32.totalorder %s44, 2
      %p471 = por %p469, %p470
      %p473 = scmp.ne.s32.totalorder %s458, %s472
      %p474 = scmp.eq.s32.totalorder %s44, 0
      %p475 = por %p473, %p474
      %s477 = sadd.s32 %s476, 1
      %p480 = scmp.eq.s32.totalorder %s38, 2
      %p481 = scmp.ne.s32.totalorder %s476, %s478
      %p482 = scmp.eq.s32.totalorder %s38, 0
      %p483 = por %p481, %p482
      %p484 = scmp.ne.s32.totalorder %s476, %s478
      %p485 = scmp.eq.s32.totalorder %s43, 2
      %p486 = por %p484, %p485
      %p487 = scmp.ne.s32.totalorder %s478, %s479
      %p488 = scmp.eq.s32.totalorder %s43, 0
      %p489 = por %p487, %p488
      %p490 = scmp.ne.s32.totalorder %s478, %s479
      %p491 = scmp.eq.s32.totalorder %s44, 2
      %p492 = por %p490, %p491
      %p494 = scmp.ne.s32.totalorder %s479, %s493
      %p495 = scmp.eq.s32.totalorder %s44, 0
      %p496 = por %p494, %p495
      %s498 = sadd.s32 %s497, 1
      %p501 = scmp.eq.s32.totalorder %s38, 2
      %p502 = scmp.ne.s32.totalorder %s497, %s499
      %p503 = scmp.eq.s32.totalorder %s38, 0
      %p504 = por %p502, %p503
      %p505 = scmp.ne.s32.totalorder %s497, %s499
      %p506 = scmp.eq.s32.totalorder %s43, 2
      %p507 = por %p505, %p506
      %p508 = scmp.ne.s32.totalorder %s499, %s500
      %p509 = scmp.eq.s32.totalorder %s43, 0
      %p510 = por %p508, %p509
      %p511 = scmp.ne.s32.totalorder %s499, %s500
      %p512 = scmp.eq.s32.totalorder %s44, 2
      %p513 = por %p511, %p512
      %p515 = scmp.ne.s32.totalorder %s500, %s514
      %p516 = scmp.eq.s32.totalorder %s44, 0
      %p517 = por %p515, %p516
      %s519 = sadd.s32 %s518, 1
      %p522 = scmp.eq.s32.totalorder %s38, 2
      %p523 = scmp.ne.s32.totalorder %s518, %s520
      %p524 = scmp.eq.s32.totalorder %s38, 0
      %p525 = por %p523, %p524
      %p526 = scmp.ne.s32.totalorder %s518, %s520
      %p527 = scmp.eq.s32.totalorder %s43, 2
      %p528 = por %p526, %p527
      %p529 = scmp.ne.s32.totalorder %s520, %s521
      %p530 = scmp.eq.s32.totalorder %s43, 0
      %p531 = por %p529, %p530
      %p532 = scmp.ne.s32.totalorder %s520, %s521
      %p533 = scmp.eq.s32.totalorder %s44, 2
      %p534 = por %p532, %p533
      %p536 = scmp.ne.s32.totalorder %s521, %s535
      %p537 = scmp.eq.s32.totalorder %s44, 0
      %p538 = por %p536, %p537
      %p539 = scmp.le.s32.totalorder 1, %s38
      %p540 = scmp.lt.s32.totalorder %s38, 4
      %p541 = pnand %p539, %p540
      %p542 = pneg %p541
      // Predicated region
      $region9: #{tpu_custom_call.1} parent=5 // pred_check
        _
      $region10: #{tpu_custom_call.1} parent=5 // pred_check_branch
        %544 = sbr.rel (%p541) target = $region12
      $region11: #{tpu_custom_call.1} parent=5 // pred_region
        %s545 = ssub.s32 %s38, 1
        // Predicated region
        $region13: #{tpu_custom_call.1} parent=11 // pred_check
          %p546 = pneg %p111
        $region14: #{tpu_custom_call.1} parent=11 // pred_check_branch
          %548 = sbr.rel (%p546) target = $region16
        $region15: #{tpu_custom_call.1} parent=11 // pred_region
          _
        $region16: #{tpu_custom_call.1} parent=11 // pred_fallthru
          _
        // Predicated region
        $region17: #{tpu_custom_call.1} parent=11 // pred_check
          %p549 = pneg %p132
        $region18: #{tpu_custom_call.1} parent=11 // pred_check_branch
          %551 = sbr.rel (%p549) target = $region20
        $region19: #{tpu_custom_call.1} parent=11 // pred_region
          _
        $region20: #{tpu_custom_call.1} parent=11 // pred_fallthru
          _
        // Predicated region
        $region21: #{tpu_custom_call.1} parent=11 // pred_check
          %p552 = pneg %p153
        $region22: #{tpu_custom_call.1} parent=11 // pred_check_branch
          %554 = sbr.rel (%p552) target = $region24
        $region23: #{tpu_custom_call.1} parent=11 // pred_region
          _
        $region24: #{tpu_custom_call.1} parent=11 // pred_fallthru
          _
        // Predicated region
        $region25: #{tpu_custom_call.1} parent=11 // pred_check
          %p555 = pneg %p174
        $region26: #{tpu_custom_call.1} parent=11 // pred_check_branch
          %557 = sbr.rel (%p555) target = $region28
        $region27: #{tpu_custom_call.1} parent=11 // pred_region
          _
        $region28: #{tpu_custom_call.1} parent=11 // pred_fallthru
          _
        // Predicated region
        $region29: #{tpu_custom_call.1} parent=11 // pred_check
          %p558 = pneg %p195
        $region30: #{tpu_custom_call.1} parent=11 // pred_check_branch
          %560 = sbr.rel (%p558) target = $region32
        $region31: #{tpu_custom_call.1} parent=11 // pred_region
          _
        $region32: #{tpu_custom_call.1} parent=11 // pred_fallthru
          _
        // Predicated region
        $region33: #{tpu_custom_call.1} parent=11 // pred_check
          %p561 = pneg %p216
        $region34: #{tpu_custom_call.1} parent=11 // pred_check_branch
          %563 = sbr.rel (%p561) target = $region36
        $region35: #{tpu_custom_call.1} parent=11 // pred_region
          _
        $region36: #{tpu_custom_call.1} parent=11 // pred_fallthru
          _
        // Predicated region
        $region37: #{tpu_custom_call.1} parent=11 // pred_check
          %p564 = pneg %p237
        $region38: #{tpu_custom_call.1} parent=11 // pred_check_branch
          %566 = sbr.rel (%p564) target = $region40
        $region39: #{tpu_custom_call.1} parent=11 // pred_region
          _
        $region40: #{tpu_custom_call.1} parent=11 // pred_fallthru
          _
        // Predicated region
        $region41: #{tpu_custom_call.1} parent=11 // pred_check
          %p567 = pneg %p258
        $region42: #{tpu_custom_call.1} parent=11 // pred_check_branch
          %569 = sbr.rel (%p567) target = $region44
        $region43: #{tpu_custom_call.1} parent=11 // pred_region
          _
        $region44: #{tpu_custom_call.1} parent=11 // pred_fallthru
          _
        // Predicated region
        $region45: #{tpu_custom_call.1} parent=11 // pred_check
          %p570 = pneg %p279
        $region46: #{tpu_custom_call.1} parent=11 // pred_check_branch
          %572 = sbr.rel (%p570) target = $region48
        $region47: #{tpu_custom_call.1} parent=11 // pred_region
          _
        $region48: #{tpu_custom_call.1} parent=11 // pred_fallthru
          _
        // Predicated region
        $region49: #{tpu_custom_call.1} parent=11 // pred_check
          %p573 = pneg %p300
        $region50: #{tpu_custom_call.1} parent=11 // pred_check_branch
          %575 = sbr.rel (%p573) target = $region52
        $region51: #{tpu_custom_call.1} parent=11 // pred_region
          _
        $region52: #{tpu_custom_call.1} parent=11 // pred_fallthru
          _
        // Predicated region
        $region53: #{tpu_custom_call.1} parent=11 // pred_check
          %p576 = pneg %p321
        $region54: #{tpu_custom_call.1} parent=11 // pred_check_branch
          %578 = sbr.rel (%p576) target = $region56
        $region55: #{tpu_custom_call.1} parent=11 // pred_region
          _
        $region56: #{tpu_custom_call.1} parent=11 // pred_fallthru
          _
        // Predicated region
        $region57: #{tpu_custom_call.1} parent=11 // pred_check
          %p579 = pneg %p342
        $region58: #{tpu_custom_call.1} parent=11 // pred_check_branch
          %581 = sbr.rel (%p579) target = $region60
        $region59: #{tpu_custom_call.1} parent=11 // pred_region
          _
        $region60: #{tpu_custom_call.1} parent=11 // pred_fallthru
          _
        // Predicated region
        $region61: #{tpu_custom_call.1} parent=11 // pred_check
          %p582 = pneg %p363
        $region62: #{tpu_custom_call.1} parent=11 // pred_check_branch
          %584 = sbr.rel (%p582) target = $region64
        $region63: #{tpu_custom_call.1} parent=11 // pred_region
          _
        $region64: #{tpu_custom_call.1} parent=11 // pred_fallthru
          _
        // Predicated region
        $region65: #{tpu_custom_call.1} parent=11 // pred_check
          %p585 = pneg %p384
        $region66: #{tpu_custom_call.1} parent=11 // pred_check_branch
          %587 = sbr.rel (%p585) target = $region68
        $region67: #{tpu_custom_call.1} parent=11 // pred_region
          _
        $region68: #{tpu_custom_call.1} parent=11 // pred_fallthru
          _
        // Predicated region
        $region69: #{tpu_custom_call.1} parent=11 // pred_check
          %p588 = pneg %p405
        $region70: #{tpu_custom_call.1} parent=11 // pred_check_branch
          %590 = sbr.rel (%p588) target = $region72
        $region71: #{tpu_custom_call.1} parent=11 // pred_region
          _
        $region72: #{tpu_custom_call.1} parent=11 // pred_fallthru
          _
        // Predicated region
        $region73: #{tpu_custom_call.1} parent=11 // pred_check
          %p591 = pneg %p426
        $region74: #{tpu_custom_call.1} parent=11 // pred_check_branch
          %593 = sbr.rel (%p591) target = $region76
        $region75: #{tpu_custom_call.1} parent=11 // pred_region
          _
        $region76: #{tpu_custom_call.1} parent=11 // pred_fallthru
          _
        // Predicated region
        $region77: #{tpu_custom_call.1} parent=11 // pred_check
          %p594 = pneg %p447
        $region78: #{tpu_custom_call.1} parent=11 // pred_check_branch
          %596 = sbr.rel (%p594) target = $region80
        $region79: #{tpu_custom_call.1} parent=11 // pred_region
          _
        $region80: #{tpu_custom_call.1} parent=11 // pred_fallthru
          _
        // Predicated region
        $region81: #{tpu_custom_call.1} parent=11 // pred_check
          %p597 = pneg %p468
        $region82: #{tpu_custom_call.1} parent=11 // pred_check_branch
          %599 = sbr.rel (%p597) target = $region84
        $region83: #{tpu_custom_call.1} parent=11 // pred_region
          _
        $region84: #{tpu_custom_call.1} parent=11 // pred_fallthru
          _
        // Predicated region
        $region85: #{tpu_custom_call.1} parent=11 // pred_check
          %p600 = pneg %p489
        $region86: #{tpu_custom_call.1} parent=11 // pred_check_branch
          %602 = sbr.rel (%p600) target = $region88
        $region87: #{tpu_custom_call.1} parent=11 // pred_region
          _
        $region88: #{tpu_custom_call.1} parent=11 // pred_fallthru
          _
        // Predicated region
        $region89: #{tpu_custom_call.1} parent=11 // pred_check
          %p603 = pneg %p510
        $region90: #{tpu_custom_call.1} parent=11 // pred_check_branch
          %605 = sbr.rel (%p603) target = $region92
        $region91: #{tpu_custom_call.1} parent=11 // pred_region
          _
        $region92: #{tpu_custom_call.1} parent=11 // pred_fallthru
          _
      $region12: #{tpu_custom_call.1} parent=5 // pred_fallthru
        _
      %p606 = scmp.lt.s32.totalorder %s38, 3
      // Predicated region
      $region93: #{tpu_custom_call.1} parent=5 // pred_check
        %p607 = pneg %p606
      $region94: #{tpu_custom_call.1} parent=5 // pred_check_branch
        %609 = sbr.rel (%p607) target = $region96
      $region95: #{tpu_custom_call.1} parent=5 // pred_region
        // Predicated region
        $region97: #{tpu_custom_call.1} parent=95 // pred_check
          %p610 = pneg %p58
        $region98: #{tpu_custom_call.1} parent=95 // pred_check_branch
          %612 = sbr.rel (%p610) target = $region100
        $region99: #{tpu_custom_call.1} parent=95 // pred_region
          %s613 = smul.u32 16, %s38
          %p614 = scmp.lt.s32.totalorder %s613, 47
          %s615 = scalar_select %p614, %s613, 47
          %s616 = smul.addr %s615, 8
          %s617 = scalar_lea.vmem %s1, %s616
          %s618 = smul.u32 16, %s38
        $region100: #{tpu_custom_call.1} parent=95 // pred_fallthru
          _
        // Predicated region
        $region101: #{tpu_custom_call.1} parent=95 // pred_check
          %p619 = pneg %p84
        $region102: #{tpu_custom_call.1} parent=95 // pred_check_branch
          %621 = sbr.rel (%p619) target = $region104
        $region103: #{tpu_custom_call.1} parent=95 // pred_region
          %s622 = smul.u32 16, %s38
          %p623 = scmp.lt.s32.totalorder %s622, 47
          %s624 = scalar_select %p623, %s622, 47
          %s625 = smul.addr %s624, 8
          %s626 = scalar_lea.vmem %s2, %s625
          %s627 = smul.u32 16, %s38
        $region104: #{tpu_custom_call.1} parent=95 // pred_fallthru
          _
      $region96: #{tpu_custom_call.1} parent=5 // pred_fallthru
        _
      %p628 = scmp.le.s32.totalorder 1, %s38
      %p629 = scmp.lt.s32.totalorder %s38, 4
      %p630 = pnand %p628, %p629
      %p631 = pneg %p630
      // Predicated region
      $region105: #{tpu_custom_call.1} parent=5 // pred_check
        _
      $region106: #{tpu_custom_call.1} parent=5 // pred_check_branch
        %633 = sbr.rel (%p630) target = $region108
      $region107: #{tpu_custom_call.1} parent=5 // pred_region
        %s634 = ssub.s32 %s38, 1
        %s635 = smul.u32 16, %s43
        %p636 = scmp.lt.s32.totalorder %s635, 47
        %s637 = scalar_select %p636, %s635, 47
        %s638 = smul.addr %s637, 8
        %s639 = scalar_lea.vmem %s1, %s638
        %p640 = pneg %p64
        %p641 = pneg %p61
        %s642 = smul.u32 16, %s43
        %p643 = scmp.lt.s32.totalorder %s642, 47
        %s644 = scalar_select %p643, %s642, 47
        %s645 = smul.addr %s644, 8
        %s646 = scalar_lea.vmem %s2, %s645
        %p647 = pneg %p90
        %p648 = pneg %p87
        %p649 = pneg %p111
        %p650 = pneg %p108
        %p651 = pneg %p132
        %p652 = pneg %p129
        %p653 = pneg %p153
        %p654 = pneg %p150
        %p655 = pneg %p174
        %p656 = pneg %p171
        %p657 = pneg %p195
        %p658 = pneg %p192
        %p659 = pneg %p216
        %p660 = pneg %p213
        %p661 = pneg %p237
        %p662 = pneg %p234
        %p663 = pneg %p258
        %p664 = pneg %p255
        %p665 = pneg %p279
        %p666 = pneg %p276
        %p667 = pneg %p300
        %p668 = pneg %p297
        %p669 = pneg %p321
        %p670 = pneg %p318
        %p671 = pneg %p342
        %p672 = pneg %p339
        %p673 = pneg %p363
        %p674 = pneg %p360
        %p675 = pneg %p384
        %p676 = pneg %p381
        %p677 = pneg %p405
        %p678 = pneg %p402
        %p679 = pneg %p426
        %p680 = pneg %p423
        %p681 = pneg %p447
        %p682 = pneg %p444
        %p683 = pneg %p468
        %p684 = pneg %p465
        %p685 = pneg %p489
        %p686 = pneg %p486
        %p687 = pneg %p510
        %p688 = pneg %p507
        %p689 = pneg %p531
        %p690 = pneg %p528
        %s691 = smul.u32 16, %s43
        %p692 = scmp.lt.s32.totalorder %s691, 47
        %s693 = scalar_select %p692, %s691, 47
        %s694 = smul.addr %s693, 8
        %s695 = scalar_lea.vmem %s1, %s694
        %s696 = smul.u32 16, %s43
        %s697 = smul.u32 16, %s43
        %p698 = scmp.lt.s32.totalorder %s697, 47
        %s699 = scalar_select %p698, %s697, 47
        %s700 = smul.addr %s699, 8
        %s701 = scalar_lea.vmem %s2, %s700
        %s702 = smul.u32 16, %s43
        %p703 = scmp.eq.s32.totalorder %s43, 0
        // Predicated region
        $region109: #{tpu_custom_call.1} parent=107 // pred_check
          %p704 = pneg %p703
        $region110: #{tpu_custom_call.1} parent=107 // pred_check_branch
          %706 = sbr.rel (%p704) target = $region112
        $region111: #{tpu_custom_call.1} parent=107 // pred_region
          %vm707 = vcmask 261120
          %708 = vst.msk [vmem:[#allocation2] sm:$0xff] %vm707, 0.0
          %709 = vst.msk [vmem:[#allocation2 + $0x8] sm:$0xff] %vm707, 0.0
          %710 = vst.msk [vmem:[#allocation2 + $0x10] sm:$0xff] %vm707, 0.0
        $region112: #{tpu_custom_call.1} parent=107 // pred_fallthru
          _
        %v711 = vld [vmem:[%s695] sm:$0xff]
        %v712 = vld [vmem:[%s695 + $0x8] sm:$0xff]
        %v713 = vld [vmem:[%s695 + $0x10] sm:$0xff]
        %v714 = vld [vmem:[%s695 + $0x18] sm:$0xff]
        %v715 = vld [vmem:[%s695 + $0x20] sm:$0xff]
        %v716 = vld [vmem:[%s695 + $0x28] sm:$0xff]
        %v717 = vld [vmem:[%s695 + $0x30] sm:$0xff]
        %v718 = vld [vmem:[%s695 + $0x38] sm:$0xff]
        %v719 = vld [vmem:[%s695 + $0x40] sm:$0xff]
        %v720 = vld [vmem:[%s695 + $0x48] sm:$0xff]
        %v721 = vld [vmem:[%s695 + $0x50] sm:$0xff]
        %v722 = vld [vmem:[%s695 + $0x58] sm:$0xff]
        %v723 = vld [vmem:[%s695 + $0x60] sm:$0xff]
        %v724 = vld [vmem:[%s695 + $0x68] sm:$0xff]
        %v725 = vld [vmem:[%s695 + $0x70] sm:$0xff]
        %v726 = vld [vmem:[%s695 + $0x78] sm:$0xff]
        %v727 = vld [vmem:[%s3] sm:$0xff]
        %v728 = vld [vmem:[%s3 + $0x8] sm:$0xff]
        %v729 = vld [vmem:[%s3 + $0x10] sm:$0xff]
        %v730 = vld [vmem:[%s3 + $0x18] sm:$0xff]
        %v731 = vld [vmem:[%s3 + $0x20] sm:$0x7]
        %v732 = vld [vmem:[%s4] sm:$0x1]
        %v734 = vperm.slane %v732, 0
        %vm736 = vcmask 285696
        %v738 = vsel %vm736, %v711, 0
        %v741 = vsel %vm736, %v712, 0
        %v744 = vsel %vm736, %v713, 0
        %v747 = vsel %vm736, %v714, 0
        %v750 = vsel %vm736, %v715, 0
        %v753 = vsel %vm736, %v716, 0
        %v756 = vsel %vm736, %v717, 0
        %v759 = vsel %vm736, %v718, 0
        %v762 = vsel %vm736, %v719, 0
        %v765 = vsel %vm736, %v720, 0
        %v768 = vsel %vm736, %v721, 0
        %v771 = vsel %vm736, %v722, 0
        %v774 = vsel %vm736, %v723, 0
        %v777 = vsel %vm736, %v724, 0
        %v780 = vsel %vm736, %v725, 0
        %v783 = vsel %vm736, %v726, 0
        %vm785 = vcmask 1042432
        %v787 = vsel %vm785, %v731, 0
        %789 = vmatpush.msra.mxu0 0.0
        %790 = vmatpush.msra.mxu0 0.0
        %791 = vmatpush.msra.mxu0 0.0
        %792 = vmatpush.msra.mxu0 0.0
        %793 = vmatpush.msra.mxu0 0.0
        %794 = vmatpush.msra.mxu0 0.0
        %795 = vmatpush.msra.mxu0 0.0
        %796 = vmatpush.msra.mxu0 0.0
        %797 = vmatpush.msra.mxu0 0.0
        %798 = vmatpush.msra.mxu0 0.0
        %799 = vmatpush.msra.mxu0 0.0
        %800 = vmatpush.msra.mxu0 %v787
        %801 = vmatpush.msra.mxu0 %v730
        %802 = vmatpush.msra.mxu0 %v729
        %803 = vmatpush.msra.mxu0 %v728
        %804 = vmatpush.msra.mxu0 %v727
        %805 = vmatmul.f32.gmra.mxu0 %v738
        %v806 = vpop.f32.mrf.mxu0
        %v807 = vadd.f32 %v734, %v806
        %808 = vmatmul.f32.gmra.mxu0 %v741
        %v809 = vpop.f32.mrf.mxu0
        %v810 = vadd.f32 %v734, %v809
        %811 = vmatmul.f32.gmra.mxu0 %v744
        %v812 = vpop.f32.mrf.mxu0
        %v813 = vadd.f32 %v734, %v812
        %814 = vmatmul.f32.gmra.mxu0 %v747
        %v815 = vpop.f32.mrf.mxu0
        %v816 = vadd.f32 %v734, %v815
        %817 = vmatmul.f32.gmra.mxu0 %v750
        %v818 = vpop.f32.mrf.mxu0
        %v819 = vadd.f32 %v734, %v818
        %820 = vmatmul.f32.gmra.mxu0 %v753
        %v821 = vpop.f32.mrf.mxu0
        %v822 = vadd.f32 %v734, %v821
        %823 = vmatmul.f32.gmra.mxu0 %v756
        %v824 = vpop.f32.mrf.mxu0
        %v825 = vadd.f32 %v734, %v824
        %826 = vmatmul.f32.gmra.mxu0 %v759
        %v827 = vpop.f32.mrf.mxu0
        %v828 = vadd.f32 %v734, %v827
        %829 = vmatmul.f32.gmra.mxu0 %v762
        %v830 = vpop.f32.mrf.mxu0
        %v831 = vadd.f32 %v734, %v830
        %832 = vmatmul.f32.gmra.mxu0 %v765
        %v833 = vpop.f32.mrf.mxu0
        %v834 = vadd.f32 %v734, %v833
        %835 = vmatmul.f32.gmra.mxu0 %v768
        %v836 = vpop.f32.mrf.mxu0
        %v837 = vadd.f32 %v734, %v836
        %838 = vmatmul.f32.gmra.mxu0 %v771
        %v839 = vpop.f32.mrf.mxu0
        %v840 = vadd.f32 %v734, %v839
        %841 = vmatmul.f32.gmra.mxu0 %v774
        %v842 = vpop.f32.mrf.mxu0
        %v843 = vadd.f32 %v734, %v842
        %844 = vmatmul.f32.gmra.mxu0 %v777
        %v845 = vpop.f32.mrf.mxu0
        %v846 = vadd.f32 %v734, %v845
        %847 = vmatmul.f32.gmra.mxu0 %v780
        %v848 = vpop.f32.mrf.mxu0
        %v849 = vadd.f32 %v734, %v848
        %850 = vmatmul.f32.gmra.mxu0 %v783
        %v851 = vpop.f32.mrf.mxu0
        %v852 = vadd.f32 %v734, %v851
        %853 = vdwg.mxu0
        %v854 = vmax.f32 %v807, 0.0
        %v855 = vmax.f32 %v810, 0.0
        %v856 = vmax.f32 %v813, 0.0
        %v857 = vmax.f32 %v816, 0.0
        %v858 = vmax.f32 %v819, 0.0
        %v859 = vmax.f32 %v822, 0.0
        %v860 = vmax.f32 %v825, 0.0
        %v861 = vmax.f32 %v828, 0.0
        %v862 = vmax.f32 %v831, 0.0
        %v863 = vmax.f32 %v834, 0.0
        %v864 = vmax.f32 %v837, 0.0
        %v865 = vmax.f32 %v840, 0.0
        %v866 = vmax.f32 %v843, 0.0
        %v867 = vmax.f32 %v846, 0.0
        %v868 = vmax.f32 %v849, 0.0
        %v869 = vmax.f32 %v852, 0.0
        %v870 = vld [vmem:[%s5] sm:$0x1]
        %v872 = vperm.slane %v870, 0
        %v874 = vmul.f32 %v854, %v872
        %v875 = vmul.f32 %v855, %v872
        %v876 = vmul.f32 %v856, %v872
        %v877 = vmul.f32 %v857, %v872
        %v878 = vmul.f32 %v858, %v872
        %v879 = vmul.f32 %v859, %v872
        %v880 = vmul.f32 %v860, %v872
        %v881 = vmul.f32 %v861, %v872
        %v882 = vmul.f32 %v862, %v872
        %v883 = vmul.f32 %v863, %v872
        %v884 = vmul.f32 %v864, %v872
        %v885 = vmul.f32 %v865, %v872
        %v886 = vmul.f32 %v866, %v872
        %v887 = vmul.f32 %v867, %v872
        %v888 = vmul.f32 %v868, %v872
        %v889 = vmul.f32 %v869, %v872
        %v890 = vld [vmem:[%s6] sm:$0x1]
        %v892 = vperm.slane %v890, 0
        %v894 = vadd.f32 %v874, %v892
        %v895 = vadd.f32 %v875, %v892
        %v896 = vadd.f32 %v876, %v892
        %v897 = vadd.f32 %v877, %v892
        %v898 = vadd.f32 %v878, %v892
        %v899 = vadd.f32 %v879, %v892
        %v900 = vadd.f32 %v880, %v892
        %v901 = vadd.f32 %v881, %v892
        %v902 = vadd.f32 %v882, %v892
        %v903 = vadd.f32 %v883, %v892
        %v904 = vadd.f32 %v884, %v892
        %v905 = vadd.f32 %v885, %v892
        %v906 = vadd.f32 %v886, %v892
        %v907 = vadd.f32 %v887, %v892
        %v908 = vadd.f32 %v888, %v892
        %v909 = vadd.f32 %v889, %v892
        %v910 = vld [vmem:[%s7] sm:$0xff]
        %v911 = vld [vmem:[%s7 + $0x8] sm:$0xff]
        %v912 = vld [vmem:[%s7 + $0x10] sm:$0xff]
        %v913 = vld [vmem:[%s7 + $0x18] sm:$0xff]
        %v914 = vld [vmem:[%s7 + $0x20] sm:$0xff]
        %v915 = vld [vmem:[%s7 + $0x28] sm:$0xff]
        %v916 = vld [vmem:[%s7 + $0x30] sm:$0xff]
        %v917 = vld [vmem:[%s7 + $0x38] sm:$0xff]
        %v918 = vld [vmem:[%s8] sm:$0x1]
        %v920 = vperm.slane %v918, 0
        %vm922 = vcmask 523264
        %v924 = vsel %vm922, %v894, 0
        %v927 = vsel %vm922, %v895, 0
        %v930 = vsel %vm922, %v896, 0
        %v933 = vsel %vm922, %v897, 0
        %v936 = vsel %vm922, %v898, 0
        %v939 = vsel %vm922, %v899, 0
        %v942 = vsel %vm922, %v900, 0
        %v945 = vsel %vm922, %v901, 0
        %v948 = vsel %vm922, %v902, 0
        %v951 = vsel %vm922, %v903, 0
        %v954 = vsel %vm922, %v904, 0
        %v957 = vsel %vm922, %v905, 0
        %v960 = vsel %vm922, %v906, 0
        %v963 = vsel %vm922, %v907, 0
        %v966 = vsel %vm922, %v908, 0
        %v969 = vsel %vm922, %v909, 0
        %971 = vmatpush.msra.mxu0 0.0
        %972 = vmatpush.msra.mxu0 0.0
        %973 = vmatpush.msra.mxu0 0.0
        %974 = vmatpush.msra.mxu0 0.0
        %975 = vmatpush.msra.mxu0 0.0
        %976 = vmatpush.msra.mxu0 0.0
        %977 = vmatpush.msra.mxu0 0.0
        %978 = vmatpush.msra.mxu0 0.0
        %979 = vmatpush.msra.mxu0 %v917
        %980 = vmatpush.msra.mxu0 %v916
        %981 = vmatpush.msra.mxu0 %v915
        %982 = vmatpush.msra.mxu0 %v914
        %983 = vmatpush.msra.mxu0 %v913
        %984 = vmatpush.msra.mxu0 %v912
        %985 = vmatpush.msra.mxu0 %v911
        %986 = vmatpush.msra.mxu0 %v910
        %987 = vmatmul.f32.gmra.mxu0 %v924
        %v988 = vpop.f32.mrf.mxu0
        %v989 = vadd.f32 %v920, %v988
        %990 = vmatmul.f32.gmra.mxu0 %v927
        %v991 = vpop.f32.mrf.mxu0
        %v992 = vadd.f32 %v920, %v991
        %993 = vmatmul.f32.gmra.mxu0 %v930
        %v994 = vpop.f32.mrf.mxu0
        %v995 = vadd.f32 %v920, %v994
        %996 = vmatmul.f32.gmra.mxu0 %v933
        %v997 = vpop.f32.mrf.mxu0
        %v998 = vadd.f32 %v920, %v997
        %999 = vmatmul.f32.gmra.mxu0 %v936
        %v1000 = vpop.f32.mrf.mxu0
        %v1001 = vadd.f32 %v920, %v1000
        %1002 = vmatmul.f32.gmra.mxu0 %v939
        %v1003 = vpop.f32.mrf.mxu0
        %v1004 = vadd.f32 %v920, %v1003
        %1005 = vmatmul.f32.gmra.mxu0 %v942
        %v1006 = vpop.f32.mrf.mxu0
        %v1007 = vadd.f32 %v920, %v1006
        %1008 = vmatmul.f32.gmra.mxu0 %v945
        %v1009 = vpop.f32.mrf.mxu0
        %v1010 = vadd.f32 %v920, %v1009
        %1011 = vmatmul.f32.gmra.mxu0 %v948
        %v1012 = vpop.f32.mrf.mxu0
        %v1013 = vadd.f32 %v920, %v1012
        %1014 = vmatmul.f32.gmra.mxu0 %v951
        %v1015 = vpop.f32.mrf.mxu0
        %v1016 = vadd.f32 %v920, %v1015
        %1017 = vmatmul.f32.gmra.mxu0 %v954
        %v1018 = vpop.f32.mrf.mxu0
        %v1019 = vadd.f32 %v920, %v1018
        %1020 = vmatmul.f32.gmra.mxu0 %v957
        %v1021 = vpop.f32.mrf.mxu0
        %v1022 = vadd.f32 %v920, %v1021
        %1023 = vmatmul.f32.gmra.mxu0 %v960
        %v1024 = vpop.f32.mrf.mxu0
        %v1025 = vadd.f32 %v920, %v1024
        %1026 = vmatmul.f32.gmra.mxu0 %v963
        %v1027 = vpop.f32.mrf.mxu0
        %v1028 = vadd.f32 %v920, %v1027
        %1029 = vmatmul.f32.gmra.mxu0 %v966
        %v1030 = vpop.f32.mrf.mxu0
        %v1031 = vadd.f32 %v920, %v1030
        %1032 = vmatmul.f32.gmra.mxu0 %v969
        %v1033 = vpop.f32.mrf.mxu0
        %v1034 = vadd.f32 %v920, %v1033
        %1035 = vdwg.mxu0
        %v1036 = vmax.f32 %v989, 0.0
        %v1037 = vmax.f32 %v992, 0.0
        %v1038 = vmax.f32 %v995, 0.0
        %v1039 = vmax.f32 %v998, 0.0
        %v1040 = vmax.f32 %v1001, 0.0
        %v1041 = vmax.f32 %v1004, 0.0
        %v1042 = vmax.f32 %v1007, 0.0
        %v1043 = vmax.f32 %v1010, 0.0
        %v1044 = vmax.f32 %v1013, 0.0
        %v1045 = vmax.f32 %v1016, 0.0
        %v1046 = vmax.f32 %v1019, 0.0
        %v1047 = vmax.f32 %v1022, 0.0
        %v1048 = vmax.f32 %v1025, 0.0
        %v1049 = vmax.f32 %v1028, 0.0
        %v1050 = vmax.f32 %v1031, 0.0
        %v1051 = vmax.f32 %v1034, 0.0
        %v1052 = vld [vmem:[%s9] sm:$0x1]
        %v1054 = vperm.slane %v1052, 0
        %v1056 = vmul.f32 %v1036, %v1054
        %v1057 = vmul.f32 %v1037, %v1054
        %v1058 = vmul.f32 %v1038, %v1054
        %v1059 = vmul.f32 %v1039, %v1054
        %v1060 = vmul.f32 %v1040, %v1054
        %v1061 = vmul.f32 %v1041, %v1054
        %v1062 = vmul.f32 %v1042, %v1054
        %v1063 = vmul.f32 %v1043, %v1054
        %v1064 = vmul.f32 %v1044, %v1054
        %v1065 = vmul.f32 %v1045, %v1054
        %v1066 = vmul.f32 %v1046, %v1054
        %v1067 = vmul.f32 %v1047, %v1054
        %v1068 = vmul.f32 %v1048, %v1054
        %v1069 = vmul.f32 %v1049, %v1054
        %v1070 = vmul.f32 %v1050, %v1054
        %v1071 = vmul.f32 %v1051, %v1054
        %v1072 = vld [vmem:[%s10] sm:$0x1]
        %v1074 = vperm.slane %v1072, 0
        %v1076 = vadd.f32 %v1056, %v1074
        %v1077 = vadd.f32 %v1057, %v1074
        %v1078 = vadd.f32 %v1058, %v1074
        %v1079 = vadd.f32 %v1059, %v1074
        %v1080 = vadd.f32 %v1060, %v1074
        %v1081 = vadd.f32 %v1061, %v1074
        %v1082 = vadd.f32 %v1062, %v1074
        %v1083 = vadd.f32 %v1063, %v1074
        %v1084 = vadd.f32 %v1064, %v1074
        %v1085 = vadd.f32 %v1065, %v1074
        %v1086 = vadd.f32 %v1066, %v1074
        %v1087 = vadd.f32 %v1067, %v1074
        %v1088 = vadd.f32 %v1068, %v1074
        %v1089 = vadd.f32 %v1069, %v1074
        %v1090 = vadd.f32 %v1070, %v1074
        %v1091 = vadd.f32 %v1071, %v1074
        %v1092 = vld [vmem:[%s11] sm:$0xff]
        %v1093 = vld [vmem:[%s11 + $0x8] sm:$0xff]
        %v1094 = vld [vmem:[%s11 + $0x10] sm:$0xff]
        %v1095 = vld [vmem:[%s11 + $0x18] sm:$0xff]
        %v1096 = vld [vmem:[%s11 + $0x20] sm:$0xff]
        %v1097 = vld [vmem:[%s11 + $0x28] sm:$0xff]
        %v1098 = vld [vmem:[%s11 + $0x30] sm:$0xff]
        %v1099 = vld [vmem:[%s11 + $0x38] sm:$0xff]
        %v1100 = vld [vmem:[%s12] sm:$0x1]
        %v1102 = vperm.slane %v1100, 0
        %v1105 = vsel %vm922, %v1076, 0
        %v1108 = vsel %vm922, %v1077, 0
        %v1111 = vsel %vm922, %v1078, 0
        %v1114 = vsel %vm922, %v1079, 0
        %v1117 = vsel %vm922, %v1080, 0
        %v1120 = vsel %vm922, %v1081, 0
        %v1123 = vsel %vm922, %v1082, 0
        %v1126 = vsel %vm922, %v1083, 0
        %v1129 = vsel %vm922, %v1084, 0
        %v1132 = vsel %vm922, %v1085, 0
        %v1135 = vsel %vm922, %v1086, 0
        %v1138 = vsel %vm922, %v1087, 0
        %v1141 = vsel %vm922, %v1088, 0
        %v1144 = vsel %vm922, %v1089, 0
        %v1147 = vsel %vm922, %v1090, 0
        %v1150 = vsel %vm922, %v1091, 0
        %1152 = vmatpush.msra.mxu0 0.0
        %1153 = vmatpush.msra.mxu0 0.0
        %1154 = vmatpush.msra.mxu0 0.0
        %1155 = vmatpush.msra.mxu0 0.0
        %1156 = vmatpush.msra.mxu0 0.0
        %1157 = vmatpush.msra.mxu0 0.0
        %1158 = vmatpush.msra.mxu0 0.0
        %1159 = vmatpush.msra.mxu0 0.0
        %1160 = vmatpush.msra.mxu0 %v1099
        %1161 = vmatpush.msra.mxu0 %v1098
        %1162 = vmatpush.msra.mxu0 %v1097
        %1163 = vmatpush.msra.mxu0 %v1096
        %1164 = vmatpush.msra.mxu0 %v1095
        %1165 = vmatpush.msra.mxu0 %v1094
        %1166 = vmatpush.msra.mxu0 %v1093
        %1167 = vmatpush.msra.mxu0 %v1092
        %1168 = vmatmul.f32.gmra.mxu0 %v1105
        %v1169 = vpop.f32.mrf.mxu0
        %v1170 = vadd.f32 %v1102, %v1169
        %1171 = vmatmul.f32.gmra.mxu0 %v1108
        %v1172 = vpop.f32.mrf.mxu0
        %v1173 = vadd.f32 %v1102, %v1172
        %1174 = vmatmul.f32.gmra.mxu0 %v1111
        %v1175 = vpop.f32.mrf.mxu0
        %v1176 = vadd.f32 %v1102, %v1175
        %1177 = vmatmul.f32.gmra.mxu0 %v1114
        %v1178 = vpop.f32.mrf.mxu0
        %v1179 = vadd.f32 %v1102, %v1178
        %1180 = vmatmul.f32.gmra.mxu0 %v1117
        %v1181 = vpop.f32.mrf.mxu0
        %v1182 = vadd.f32 %v1102, %v1181
        %1183 = vmatmul.f32.gmra.mxu0 %v1120
        %v1184 = vpop.f32.mrf.mxu0
        %v1185 = vadd.f32 %v1102, %v1184
        %1186 = vmatmul.f32.gmra.mxu0 %v1123
        %v1187 = vpop.f32.mrf.mxu0
        %v1188 = vadd.f32 %v1102, %v1187
        %1189 = vmatmul.f32.gmra.mxu0 %v1126
        %v1190 = vpop.f32.mrf.mxu0
        %v1191 = vadd.f32 %v1102, %v1190
        %1192 = vmatmul.f32.gmra.mxu0 %v1129
        %v1193 = vpop.f32.mrf.mxu0
        %v1194 = vadd.f32 %v1102, %v1193
        %1195 = vmatmul.f32.gmra.mxu0 %v1132
        %v1196 = vpop.f32.mrf.mxu0
        %v1197 = vadd.f32 %v1102, %v1196
        %1198 = vmatmul.f32.gmra.mxu0 %v1135
        %v1199 = vpop.f32.mrf.mxu0
        %v1200 = vadd.f32 %v1102, %v1199
        %1201 = vmatmul.f32.gmra.mxu0 %v1138
        %v1202 = vpop.f32.mrf.mxu0
        %v1203 = vadd.f32 %v1102, %v1202
        %1204 = vmatmul.f32.gmra.mxu0 %v1141
        %v1205 = vpop.f32.mrf.mxu0
        %v1206 = vadd.f32 %v1102, %v1205
        %1207 = vmatmul.f32.gmra.mxu0 %v1144
        %v1208 = vpop.f32.mrf.mxu0
        %v1209 = vadd.f32 %v1102, %v1208
        %1210 = vmatmul.f32.gmra.mxu0 %v1147
        %v1211 = vpop.f32.mrf.mxu0
        %v1212 = vadd.f32 %v1102, %v1211
        %1213 = vmatmul.f32.gmra.mxu0 %v1150
        %v1214 = vpop.f32.mrf.mxu0
        %v1215 = vadd.f32 %v1102, %v1214
        %1216 = vdwg.mxu0
        %v1217 = vmax.f32 %v1170, 0.0
        %v1218 = vmax.f32 %v1173, 0.0
        %v1219 = vmax.f32 %v1176, 0.0
        %v1220 = vmax.f32 %v1179, 0.0
        %v1221 = vmax.f32 %v1182, 0.0
        %v1222 = vmax.f32 %v1185, 0.0
        %v1223 = vmax.f32 %v1188, 0.0
        %v1224 = vmax.f32 %v1191, 0.0
        %v1225 = vmax.f32 %v1194, 0.0
        %v1226 = vmax.f32 %v1197, 0.0
        %v1227 = vmax.f32 %v1200, 0.0
        %v1228 = vmax.f32 %v1203, 0.0
        %v1229 = vmax.f32 %v1206, 0.0
        %v1230 = vmax.f32 %v1209, 0.0
        %v1231 = vmax.f32 %v1212, 0.0
        %v1232 = vmax.f32 %v1215, 0.0
        %v1233 = vld [vmem:[%s13] sm:$0x1]
        %v1235 = vperm.slane %v1233, 0
        %v1237 = vmul.f32 %v1217, %v1235
        %v1238 = vmul.f32 %v1218, %v1235
        %v1239 = vmul.f32 %v1219, %v1235
        %v1240 = vmul.f32 %v1220, %v1235
        %v1241 = vmul.f32 %v1221, %v1235
        %v1242 = vmul.f32 %v1222, %v1235
        %v1243 = vmul.f32 %v1223, %v1235
        %v1244 = vmul.f32 %v1224, %v1235
        %v1245 = vmul.f32 %v1225, %v1235
        %v1246 = vmul.f32 %v1226, %v1235
        %v1247 = vmul.f32 %v1227, %v1235
        %v1248 = vmul.f32 %v1228, %v1235
        %v1249 = vmul.f32 %v1229, %v1235
        %v1250 = vmul.f32 %v1230, %v1235
        %v1251 = vmul.f32 %v1231, %v1235
        %v1252 = vmul.f32 %v1232, %v1235
        %v1253 = vld [vmem:[%s14] sm:$0x1]
        %v1255 = vperm.slane %v1253, 0
        %v1257 = vadd.f32 %v1237, %v1255
        %v1258 = vadd.f32 %v1238, %v1255
        %v1259 = vadd.f32 %v1239, %v1255
        %v1260 = vadd.f32 %v1240, %v1255
        %v1261 = vadd.f32 %v1241, %v1255
        %v1262 = vadd.f32 %v1242, %v1255
        %v1263 = vadd.f32 %v1243, %v1255
        %v1264 = vadd.f32 %v1244, %v1255
        %v1265 = vadd.f32 %v1245, %v1255
        %v1266 = vadd.f32 %v1246, %v1255
        %v1267 = vadd.f32 %v1247, %v1255
        %v1268 = vadd.f32 %v1248, %v1255
        %v1269 = vadd.f32 %v1249, %v1255
        %v1270 = vadd.f32 %v1250, %v1255
        %v1271 = vadd.f32 %v1251, %v1255
        %v1272 = vadd.f32 %v1252, %v1255
        %v1273 = vld [vmem:[%s701] sm:$0xff]
        %v1274 = vld [vmem:[%s701 + $0x8] sm:$0xff]
        %v1275 = vld [vmem:[%s701 + $0x10] sm:$0xff]
        %v1276 = vld [vmem:[%s701 + $0x18] sm:$0xff]
        %v1277 = vld [vmem:[%s701 + $0x20] sm:$0xff]
        %v1278 = vld [vmem:[%s701 + $0x28] sm:$0xff]
        %v1279 = vld [vmem:[%s701 + $0x30] sm:$0xff]
        %v1280 = vld [vmem:[%s701 + $0x38] sm:$0xff]
        %v1281 = vld [vmem:[%s701 + $0x40] sm:$0xff]
        %v1282 = vld [vmem:[%s701 + $0x48] sm:$0xff]
        %v1283 = vld [vmem:[%s701 + $0x50] sm:$0xff]
        %v1284 = vld [vmem:[%s701 + $0x58] sm:$0xff]
        %v1285 = vld [vmem:[%s701 + $0x60] sm:$0xff]
        %v1286 = vld [vmem:[%s701 + $0x68] sm:$0xff]
        %v1287 = vld [vmem:[%s701 + $0x70] sm:$0xff]
        %v1288 = vld [vmem:[%s701 + $0x78] sm:$0xff]
        %s1289 = smul.u32 %s43, 2
        %s1290 = sld [smem:[#allocation4 + %s1289]]
        %s1291 = sadd.s32 %s1289, 1
        %s1292 = sld [smem:[#allocation4 + %s1291]]
        %s1293 = sadd.s32 %s1292, 1
        // While loop
        $region113: #{tpu_custom_call.1} parent=107 // loop_pre_header
          _
        $region114: #{tpu_custom_call.1} parent=107 // loop_header
          %s1295 = sphi %s1290, %s1297
          %p1296 = scmp.ge.s32.totalorder %s1295, %s1293
        $region115: #{tpu_custom_call.1} parent=107 // loop_header_branch
          %1299 = sbr.rel (%p1296) target = $region119
        $region116: #{tpu_custom_call.1} parent=107 // loop_body
          %v1300 = vstv %s1295
          %vm1301 = vcmp.eq.s32.totalorder %v1273, %v1300
          %vm1302 = vcmp.eq.s32.totalorder %v1274, %v1300
          %vm1303 = vcmp.eq.s32.totalorder %v1275, %v1300
          %vm1304 = vcmp.eq.s32.totalorder %v1276, %v1300
          %vm1305 = vcmp.eq.s32.totalorder %v1277, %v1300
          %vm1306 = vcmp.eq.s32.totalorder %v1278, %v1300
          %vm1307 = vcmp.eq.s32.totalorder %v1279, %v1300
          %vm1308 = vcmp.eq.s32.totalorder %v1280, %v1300
          %vm1309 = vcmp.eq.s32.totalorder %v1281, %v1300
          %vm1310 = vcmp.eq.s32.totalorder %v1282, %v1300
          %vm1311 = vcmp.eq.s32.totalorder %v1283, %v1300
          %vm1312 = vcmp.eq.s32.totalorder %v1284, %v1300
          %vm1313 = vcmp.eq.s32.totalorder %v1285, %v1300
          %vm1314 = vcmp.eq.s32.totalorder %v1286, %v1300
          %vm1315 = vcmp.eq.s32.totalorder %v1287, %v1300
          %vm1316 = vcmp.eq.s32.totalorder %v1288, %v1300
          %v1317 = vsel %vm1301, 1, 0
          %v1318 = vsel %vm1302, 1, 0
          %v1319 = vsel %vm1303, 1, 0
          %v1320 = vsel %vm1304, 1, 0
          %v1321 = vsel %vm1305, 1, 0
          %v1322 = vsel %vm1306, 1, 0
          %v1323 = vsel %vm1307, 1, 0
          %v1324 = vsel %vm1308, 1, 0
          %v1325 = vsel %vm1309, 1, 0
          %v1326 = vsel %vm1310, 1, 0
          %v1327 = vsel %vm1311, 1, 0
          %v1328 = vsel %vm1312, 1, 0
          %v1329 = vsel %vm1313, 1, 0
          %v1330 = vsel %vm1314, 1, 0
          %v1331 = vsel %vm1315, 1, 0
          %v1332 = vsel %vm1316, 1, 0
          %1333 = vset.pattern.permute.xlu0 0
          %1334 = vperm.xlu0 %1333, %v1317
          %v1335 = vpop.permute.xlu0 %1334
          %1336 = vset.pattern.permute.xlu0 0
          %1337 = vperm.xlu0 %1336, %v1318
          %v1338 = vpop.permute.xlu0 %1337
          %1339 = vset.pattern.permute.xlu0 0
          %1340 = vperm.xlu0 %1339, %v1319
          %v1341 = vpop.permute.xlu0 %1340
          %1342 = vset.pattern.permute.xlu0 0
          %1343 = vperm.xlu0 %1342, %v1320
          %v1344 = vpop.permute.xlu0 %1343
          %1345 = vset.pattern.permute.xlu0 0
          %1346 = vperm.xlu0 %1345, %v1321
          %v1347 = vpop.permute.xlu0 %1346
          %1348 = vset.pattern.permute.xlu0 0
          %1349 = vperm.xlu0 %1348, %v1322
          %v1350 = vpop.permute.xlu0 %1349
          %1351 = vset.pattern.permute.xlu0 0
          %1352 = vperm.xlu0 %1351, %v1323
          %v1353 = vpop.permute.xlu0 %1352
          %1354 = vset.pattern.permute.xlu0 0
          %1355 = vperm.xlu0 %1354, %v1324
          %v1356 = vpop.permute.xlu0 %1355
          %1357 = vset.pattern.permute.xlu0 0
          %1358 = vperm.xlu0 %1357, %v1325
          %v1359 = vpop.permute.xlu0 %1358
          %1360 = vset.pattern.permute.xlu0 0
          %1361 = vperm.xlu0 %1360, %v1326
          %v1362 = vpop.permute.xlu0 %1361
          %1363 = vset.pattern.permute.xlu0 0
          %1364 = vperm.xlu0 %1363, %v1327
          %v1365 = vpop.permute.xlu0 %1364
          %1366 = vset.pattern.permute.xlu0 0
          %1367 = vperm.xlu0 %1366, %v1328
          %v1368 = vpop.permute.xlu0 %1367
          %1369 = vset.pattern.permute.xlu0 0
          %1370 = vperm.xlu0 %1369, %v1329
          %v1371 = vpop.permute.xlu0 %1370
          %1372 = vset.pattern.permute.xlu0 0
          %1373 = vperm.xlu0 %1372, %v1330
          %v1374 = vpop.permute.xlu0 %1373
          %1375 = vset.pattern.permute.xlu0 0
          %1376 = vperm.xlu0 %1375, %v1331
          %v1377 = vpop.permute.xlu0 %1376
          %1378 = vset.pattern.permute.xlu0 0
          %1379 = vperm.xlu0 %1378, %v1332
          %v1380 = vpop.permute.xlu0 %1379
          %vm1381 = vcmp.eq.s32.totalorder %v1335, 1
          %vm1382 = vcmp.eq.s32.totalorder %v1338, 1
          %vm1383 = vcmp.eq.s32.totalorder %v1341, 1
          %vm1384 = vcmp.eq.s32.totalorder %v1344, 1
          %vm1385 = vcmp.eq.s32.totalorder %v1347, 1
          %vm1386 = vcmp.eq.s32.totalorder %v1350, 1
          %vm1387 = vcmp.eq.s32.totalorder %v1353, 1
          %vm1388 = vcmp.eq.s32.totalorder %v1356, 1
          %vm1389 = vcmp.eq.s32.totalorder %v1359, 1
          %vm1390 = vcmp.eq.s32.totalorder %v1362, 1
          %vm1391 = vcmp.eq.s32.totalorder %v1365, 1
          %vm1392 = vcmp.eq.s32.totalorder %v1368, 1
          %vm1393 = vcmp.eq.s32.totalorder %v1371, 1
          %vm1394 = vcmp.eq.s32.totalorder %v1374, 1
          %vm1395 = vcmp.eq.s32.totalorder %v1377, 1
          %vm1396 = vcmp.eq.s32.totalorder %v1380, 1
          %v1397 = vsel %vm1381, %v1257, -3e+38
          %v1398 = vsel %vm1382, %v1258, -3e+38
          %v1399 = vsel %vm1383, %v1259, -3e+38
          %v1400 = vsel %vm1384, %v1260, -3e+38
          %v1401 = vsel %vm1385, %v1261, -3e+38
          %v1402 = vsel %vm1386, %v1262, -3e+38
          %v1403 = vsel %vm1387, %v1263, -3e+38
          %v1404 = vsel %vm1388, %v1264, -3e+38
          %v1405 = vsel %vm1389, %v1265, -3e+38
          %v1406 = vsel %vm1390, %v1266, -3e+38
          %v1407 = vsel %vm1391, %v1267, -3e+38
          %v1408 = vsel %vm1392, %v1268, -3e+38
          %v1409 = vsel %vm1393, %v1269, -3e+38
          %v1410 = vsel %vm1394, %v1270, -3e+38
          %v1411 = vsel %vm1395, %v1271, -3e+38
          %v1412 = vsel %vm1396, %v1272, -3e+38
          %vm1413 = vcmask 261120
          %v1414 = vsel %vm1413, %v1397, -inf
          %v1415 = vsel %vm1413, %v1398, -inf
          %v1416 = vsel %vm1413, %v1399, -inf
          %v1417 = vsel %vm1413, %v1400, -inf
          %v1418 = vsel %vm1413, %v1401, -inf
          %v1419 = vmax.f32 %v1414, %v1418
          %v1420 = vsel %vm1413, %v1402, -inf
          %v1421 = vmax.f32 %v1415, %v1420
          %v1422 = vsel %vm1413, %v1403, -inf
          %v1423 = vmax.f32 %v1416, %v1422
          %v1424 = vsel %vm1413, %v1404, -inf
          %v1425 = vmax.f32 %v1417, %v1424
          %v1426 = vsel %vm1413, %v1405, -inf
          %v1427 = vmax.f32 %v1419, %v1426
          %v1428 = vsel %vm1413, %v1406, -inf
          %v1429 = vmax.f32 %v1421, %v1428
          %v1430 = vsel %vm1413, %v1407, -inf
          %v1431 = vmax.f32 %v1423, %v1430
          %v1432 = vsel %vm1413, %v1408, -inf
          %v1433 = vmax.f32 %v1425, %v1432
          %v1434 = vsel %vm1413, %v1409, -inf
          %v1435 = vmax.f32 %v1427, %v1434
          %v1436 = vsel %vm1413, %v1410, -inf
          %v1437 = vmax.f32 %v1429, %v1436
          %v1438 = vsel %vm1413, %v1411, -inf
          %v1439 = vmax.f32 %v1431, %v1438
          %v1440 = vsel %vm1413, %v1412, -inf
          %v1441 = vmax.f32 %v1433, %v1440
          %v1442 = vmax.f32 %v1435, %v1437
          %v1443 = vmax.f32 %v1439, %v1441
          %v1444 = vmax.f32 %v1442, %v1443
          %v1445 = vrot.slane %v1444, 4
          %v1446 = vmax.f32 %v1444, %v1445
          %v1447 = vrot.slane %v1446, 2
          %v1448 = vmax.f32 %v1446, %v1447
          %v1449 = vrot.slane %v1448, 1
          %v1450 = vmax.f32 %v1448, %v1449
          %s1451 = scalar_lea.vmem [#allocation2], %s1295
          %v1452 = vld [vmem:[%s1451] sm:$0x1]
          %v1453 = vmax.f32 %v1452, %v1450
          %vm1454 = vcmask 253952
          %1455 = vst.msk [vmem:[%s1451] sm:$0x1] %vm1454, %v1453
        $region117: #{tpu_custom_call.1} parent=107 // loop_footer
          %s1297 = sadd.s32 %s1295, 1
        $region118: #{tpu_custom_call.1} parent=107 // loop_footer_branch
          %1294 = sbr.rel target = $region114
        $region119: #{tpu_custom_call.1} parent=107 // loop_exit
          _
        %p1456 = scmp.eq.s32.totalorder %s43, 2
        // Predicated region
        $region120: #{tpu_custom_call.1} parent=107 // pred_check
          %p1457 = pneg %p1456
        $region121: #{tpu_custom_call.1} parent=107 // pred_check_branch
          %1459 = sbr.rel (%p1457) target = $region123
        $region122: #{tpu_custom_call.1} parent=107 // pred_region
          %v1460 = vld [vmem:[#allocation2] sm:$0xff]
          %v1461 = vld [vmem:[#allocation2 + $0x8] sm:$0xff]
          %v1462 = vld [vmem:[#allocation2 + $0x10] sm:$0xff]
          %v1463 = vld [vmem:[%s15] sm:$0xff]
          %v1464 = vld [vmem:[%s15 + $0x8] sm:$0xff]
          %v1465 = vld [vmem:[%s15 + $0x10] sm:$0xff]
          %v1466 = vld [vmem:[%s15 + $0x18] sm:$0xff]
          %v1467 = vld [vmem:[%s16] sm:$0x1]
          %v1469 = vperm.slane %v1467, 0
          %vm1471 = vcmask 261120
          %v1473 = vsel %vm1471, %v1460, 0
          %v1476 = vsel %vm1471, %v1461, 0
          %v1479 = vsel %vm1471, %v1462, 0
          %1481 = vmatpush.msra.mxu0 0.0
          %1482 = vmatpush.msra.mxu0 0.0
          %1483 = vmatpush.msra.mxu0 0.0
          %1484 = vmatpush.msra.mxu0 0.0
          %1485 = vmatpush.msra.mxu0 0.0
          %1486 = vmatpush.msra.mxu0 0.0
          %1487 = vmatpush.msra.mxu0 0.0
          %1488 = vmatpush.msra.mxu0 0.0
          %1489 = vmatpush.msra.mxu0 0.0
          %1490 = vmatpush.msra.mxu0 0.0
          %1491 = vmatpush.msra.mxu0 0.0
          %1492 = vmatpush.msra.mxu0 0.0
          %1493 = vmatpush.msra.mxu0 %v1466
          %1494 = vmatpush.msra.mxu0 %v1465
          %1495 = vmatpush.msra.mxu0 %v1464
          %1496 = vmatpush.msra.mxu0 %v1463
          %1497 = vmatmul.f32.gmra.mxu0 %v1473
          %v1498 = vpop.f32.mrf.mxu0
          %v1499 = vadd.f32 %v1469, %v1498
          %1500 = vmatmul.f32.gmra.mxu0 %v1476
          %v1501 = vpop.f32.mrf.mxu0
          %v1502 = vadd.f32 %v1469, %v1501
          %1503 = vmatmul.f32.gmra.mxu0 %v1479
          %v1504 = vpop.f32.mrf.mxu0
          %v1505 = vadd.f32 %v1469, %v1504
          %1506 = vdwg.mxu0
          %v1507 = vmax.f32 %v1499, 0.0
          %v1508 = vmax.f32 %v1502, 0.0
          %v1509 = vmax.f32 %v1505, 0.0
          %v1510 = vld [vmem:[%s17] sm:$0x1]
          %v1512 = vperm.slane %v1510, 0
          %v1514 = vmul.f32 %v1507, %v1512
          %v1515 = vmul.f32 %v1508, %v1512
          %v1516 = vmul.f32 %v1509, %v1512
          %v1517 = vld [vmem:[%s18] sm:$0x1]
          %v1519 = vperm.slane %v1517, 0
          %v1521 = vadd.f32 %v1514, %v1519
          %v1522 = vadd.f32 %v1515, %v1519
          %v1523 = vadd.f32 %v1516, %v1519
          %v1524 = vld [vmem:[%s19] sm:$0xff]
          %v1525 = vld [vmem:[%s19 + $0x8] sm:$0xff]
          %v1526 = vld [vmem:[%s19 + $0x10] sm:$0xff]
          %v1527 = vld [vmem:[%s19 + $0x18] sm:$0xff]
          %v1528 = vld [vmem:[%s20] sm:$0x1]
          %v1530 = vperm.slane %v1528, 0
          %v1533 = vsel %vm1471, %v1521, 0
          %v1536 = vsel %vm1471, %v1522, 0
          %v1539 = vsel %vm1471, %v1523, 0
          %1541 = vmatpush.msra.mxu0 0.0
          %1542 = vmatpush.msra.mxu0 0.0
          %1543 = vmatpush.msra.mxu0 0.0
          %1544 = vmatpush.msra.mxu0 0.0
          %1545 = vmatpush.msra.mxu0 0.0
          %1546 = vmatpush.msra.mxu0 0.0
          %1547 = vmatpush.msra.mxu0 0.0
          %1548 = vmatpush.msra.mxu0 0.0
          %1549 = vmatpush.msra.mxu0 0.0
          %1550 = vmatpush.msra.mxu0 0.0
          %1551 = vmatpush.msra.mxu0 0.0
          %1552 = vmatpush.msra.mxu0 0.0
          %1553 = vmatpush.msra.mxu0 %v1527
          %1554 = vmatpush.msra.mxu0 %v1526
          %1555 = vmatpush.msra.mxu0 %v1525
          %1556 = vmatpush.msra.mxu0 %v1524
          %1557 = vmatmul.f32.gmra.mxu0 %v1533
          %v1558 = vpop.f32.mrf.mxu0
          %v1559 = vadd.f32 %v1530, %v1558
          %1560 = vmatmul.f32.gmra.mxu0 %v1536
          %v1561 = vpop.f32.mrf.mxu0
          %v1562 = vadd.f32 %v1530, %v1561
          %1563 = vmatmul.f32.gmra.mxu0 %v1539
          %v1564 = vpop.f32.mrf.mxu0
          %v1565 = vadd.f32 %v1530, %v1564
          %1566 = vdwg.mxu0
          %v1567 = vmax.f32 %v1559, 0.0
          %v1568 = vmax.f32 %v1562, 0.0
          %v1569 = vmax.f32 %v1565, 0.0
          %v1570 = vld [vmem:[%s21] sm:$0x1]
          %v1572 = vperm.slane %v1570, 0
          %v1574 = vmul.f32 %v1567, %v1572
          %v1575 = vmul.f32 %v1568, %v1572
          %v1576 = vmul.f32 %v1569, %v1572
          %v1577 = vld [vmem:[%s22] sm:$0x1]
          %v1579 = vperm.slane %v1577, 0
          %v1581 = vadd.f32 %v1574, %v1579
          %v1582 = vadd.f32 %v1575, %v1579
          %v1583 = vadd.f32 %v1576, %v1579
          %1584 = vst.msk [vmem:[#allocation5] sm:$0xff] %vm1471, %v1581
          %1585 = vst.msk [vmem:[#allocation5 + $0x8] sm:$0xff] %vm1471, %v1582
          %1586 = vst.msk [vmem:[#allocation5 + $0x10] sm:$0xff] %vm1471, %v1583
        $region123: #{tpu_custom_call.1} parent=107 // pred_fallthru
          _
        // Predicated region
        $region124: #{tpu_custom_call.1} parent=107 // pred_check
          %p1587 = pneg %p528
        $region125: #{tpu_custom_call.1} parent=107 // pred_check_branch
          %1589 = sbr.rel (%p1587) target = $region127
        $region126: #{tpu_custom_call.1} parent=107 // pred_region
          %1591 = vsyncadd [#allocation6], 0
          %s1592 = sshll.u32 [#allocation5], 4
          %s1593 = int_to_ptr.vmem [resolvable:$true] %s1592
          %s1594 = sshll.u32 %s23, 4
          %s1595 = int_to_ptr.hbm [resolvable:$true] %s1594
          %1600 = dma.vmem_to_hbm [thread:$0]  %s1593, 384, %s1595, [#allocation6], 128, 128, 8
        $region127: #{tpu_custom_call.1} parent=107 // pred_fallthru
          _
        // Predicated region
        $region128: #{tpu_custom_call.1} parent=107 // pred_check
          %p1601 = pneg %p528
        $region129: #{tpu_custom_call.1} parent=107 // pred_check_branch
          %1603 = sbr.rel (%p1601) target = $region131
        $region130: #{tpu_custom_call.1} parent=107 // pred_region
          %1605 = dma.done [#allocation6], 384
        $region131: #{tpu_custom_call.1} parent=107 // pred_fallthru
          _
      $region108: #{tpu_custom_call.1} parent=5 // pred_fallthru
        _
      %p1606 = scmp.le.s32.totalorder 2, %s38
      // Predicated region
      $region132: #{tpu_custom_call.1} parent=5 // pred_check
        %p1607 = pneg %p1606
      $region133: #{tpu_custom_call.1} parent=5 // pred_check_branch
        %1609 = sbr.rel (%p1607) target = $region135
      $region134: #{tpu_custom_call.1} parent=5 // pred_region
        %s1610 = ssub.s32 %s38, 2
      $region135: #{tpu_custom_call.1} parent=5 // pred_fallthru
        _
    $region6: #{tpu_custom_call.1} parent=1 // loop_footer
      %s42 = sadd.s32 1, %s38
    $region7: #{tpu_custom_call.1} parent=1 // loop_footer_branch
      %37 = sbr.rel target = $region3
    $region8: #{tpu_custom_call.1} parent=1 // loop_exit
      _
    %1611 = vsyncpa [#allocation6], 1
    %s1612 = scalar_lea.sflag [#allocation6], 1
    %1613 = vsyncpa %s1612, 1

</llo_original>
